<compile_context>
chip_gen: v5e
topology: v5e:2x2
jax: 0.10.0
libtpu: 0.0.40
codegen_flags: <defaults>
</compile_context>

<pallas_src>
import functools

import jax
import jax.numpy as jnp
from jax import lax
from jax.experimental import pallas as pl
from jax.experimental.pallas import tpu as pltpu


def _elu(x):
    # exact ELU(alpha=1); clamp exp arg so the unselected branch can't produce inf
    return jnp.where(x > 0, x, jnp.exp(jnp.minimum(x, 0.0)) - 1.0)


def _leaky_relu(x, slope=0.2):
    return jnp.where(x > 0, x, slope * x)


def _masked_softmax_rows(s, compute_dtype):
    # `s` already carries the additive -1e30 mask; rows are guaranteed non-empty
    # (self-loops), so the denominator is always >= exp(0) = 1.
    m = jnp.max(s, axis=-1, keepdims=True)                              # f32 statistics
    p = jnp.exp((s - m).astype(compute_dtype))                          # EUP; bf16 on v6e/v7x
    denom = jnp.sum(p, axis=-1, keepdims=True, dtype=jnp.float32)       # f32 accumulation
    inv = pl.reciprocal(denom, approx=True)                             # EUP slot, ~free
    # alpha is consumed by a bf16 MXU matmul, so hand it back in bf16 directly
    return (p * inv.astype(p.dtype)).astype(jnp.bfloat16)


def gat_fused_kernel(x_ref, adj_ref, w0e_ref, al0_ref, b0_ref,
                     w1e_ref, al1_ref, b1_ref, out_ref,
                     *, num_heads, head_dim, n_classes, compute_dtype):
    f32 = jnp.float32
    bf16 = jnp.bfloat16
    HF = num_heads * head_dim

    # Additive adjacency bias built once from the int8 mask, reused by all 9 softmaxes.
    adj_f = adj_ref[...].astype(f32)                                    # (N, N)
    adj_bias = jnp.where(adj_f > 0.0, 0.0, -1e30)                       # 0 on edge j->i

    x = x_ref[...]                                                      # (N, din) bf16

    # ---------------- layer 0: GATConv(input_dim -> H*F0), all heads fused ---------------
    # One MXU pass yields the projected features of every head (lanes [0, HF)) AND the
    # per-head "right" logits er[i, h] (lanes [HF, HF+H)) via the packed extra columns.
    proj0 = jnp.dot(x, w0e_ref[...], preferred_element_type=f32)        # (N, HF + H) f32
    feat0 = proj0[:, :HF]                                               # (N, HF)
    er0 = proj0[:, HF:HF + num_heads]                                   # (N, H)
    # "left" logits for all heads, row-oriented: (H, din) . (N, din)^T -> (H, N)
    elT0 = lax.dot_general(al0_ref[...], x, (((1,), (1,)), ((), ())),
                           preferred_element_type=f32)                  # (H, N)

    feat0_b = feat0.astype(bf16)
    head_outs = []
    for h in range(num_heads):                                          # static unroll (H=8)
        lo = h * head_dim
        er_col = er0[:, h:h + 1]                                        # (N, 1) dest logit
        el_row = elT0[h:h + 1, :]                                       # (1, N) src logit
        s = _leaky_relu(er_col + el_row) + adj_bias                     # (N, N): edge j -> i
        alpha = _masked_softmax_rows(s, compute_dtype)                  # (N, N) bf16
        feat_h = feat0_b[:, lo:lo + head_dim]                           # (N, F0) bf16
        head_outs.append(jnp.dot(alpha, feat_h, preferred_element_type=f32))
    h0 = jnp.concatenate(head_outs, axis=-1)                            # (N, HF) f32

    # bias -> GATConv activation (ELU) -> flatten -> outer F.elu (the reference module
    # applies ELU twice) -> Dropout(0.5) as inference-mode identity.
    # TODO(synk): training-mode dropout would need an RNG stream; omitted (inference).
    hidden = _elu(_elu(h0 + b0_ref[...]))                               # (N, HF) f32
    hidden_b = hidden.astype(bf16)

    # ---------------- layer 1: GATConv(num_hidden -> n_classes), single head -------------
    # Extra packed column gives er1 for free on the same MXU pass.
    proj1 = jnp.dot(hidden_b, w1e_ref[...], preferred_element_type=f32)  # (N, C + 1) f32
    feat1 = proj1[:, :n_classes]                                        # (N, C)
    er1 = proj1[:, n_classes:n_classes + 1]                             # (N, 1)
    el1 = lax.dot_general(al1_ref[...], hidden_b, (((1,), (1,)), ((), ())),
                          preferred_element_type=f32)                   # (1, N)
    s1 = _leaky_relu(er1 + el1) + adj_bias
    alpha1 = _masked_softmax_rows(s1, compute_dtype)                    # (N, N) bf16
    out = jnp.dot(alpha1, feat1.astype(bf16), preferred_element_type=f32) + b1_ref[...]
    # .mean(dim=1) over the single head is the identity
    out_ref[...] = out


def _bf16_elementwise_supported():
    # v6e / v7x have bf16 VPU/EUP paths; v5e and older do not (would be emulated).
    try:
        kind = jax.devices()[0].device_kind.lower()
    except Exception:
        return False
    return ("v6" in kind) or ("v7" in kind)


def gat_full_dgl_forward(x, adj, params):
    """Matches GAT_FULL_DGL.forward with n_layers=2 (inference).  Single fused pallas_call."""
    f32 = jnp.float32
    bf16 = jnp.bfloat16
    N, din = x.shape
    H, _, F0 = params["w0"].shape
    C = params["w1"].shape[-1]
    HF = H * F0

    # ---- hoisted wrapper-side packing (done once per forward) ----
    adj_mask = (adj > 0).astype(jnp.int8)                               # (N, N) int8 mask

    w0 = params["w0"].astype(f32)                                       # (H, din, F0)
    al0 = params["al0"].astype(f32)                                     # (H, F0)
    ar0 = params["ar0"].astype(f32)                                     # (H, F0)
    # head-major lane concat of the per-head projections: (din, H*F0)
    w0_flat = jnp.transpose(w0, (1, 0, 2)).reshape(din, HF)
    # extra columns: col h = w0[h] @ ar0[h]  -> er[i, h] rides the projection matmul
    w0_er = jnp.einsum("hdf,hf->dh", w0, ar0)                           # (din, H)
    w0_ext = jnp.concatenate([w0_flat, w0_er], axis=-1).astype(bf16)    # (din, HF + H)
    # left-logit packing: row h = w0[h] @ al0[h]  -> elT[h, j] = <x[j], al0_packed[h]>
    al0_packed = jnp.einsum("hdf,hf->hd", w0, al0).astype(bf16)         # (H, din)
    b0_flat = params["b0"].astype(f32).reshape(1, HF)                   # DGL head-concat layout

    w1 = params["w1"].astype(f32)[0]                                    # (HF, C)
    al1 = params["al1"].astype(f32)[0]                                  # (C,)
    ar1 = params["ar1"].astype(f32)[0]                                  # (C,)
    w1_er = (w1 @ ar1)[:, None]                                         # (HF, 1)
    w1_ext = jnp.concatenate([w1, w1_er], axis=-1).astype(bf16)         # (HF, C + 1)
    al1_packed = (w1 @ al1)[None, :].astype(bf16)                       # (1, HF)
    b1 = params["b1"].astype(f32)                                       # (1, C)

    compute_dtype = bf16 if _bf16_elementwise_supported() else f32

    kernel = functools.partial(gat_fused_kernel, num_heads=H, head_dim=F0,
                               n_classes=C, compute_dtype=compute_dtype)
    return pl.pallas_call(
        kernel,
        out_shape=jax.ShapeDtypeStruct((N, C), f32),
    )(x.astype(bf16), adj_mask, w0_ext, al0_packed, b0_flat, w1_ext, al1_packed, b1)


if __name__ == "__main__":
    # small, module-consistent shapes
    N = 64           # number of graph nodes
    input_dim = 16
    num_hidden = 64
    num_heads = 8
    n_classes = 4
    F0 = num_hidden // num_heads   # 8 per-head hidden features

    key = jax.random.PRNGKey(0)
    ks = jax.random.split(key, 8)

    x = jax.random.normal(ks[0], (N, input_dim), dtype=jnp.float32)
    adj = (jax.random.uniform(ks[1], (N, N)) < 0.3).astype(jnp.float32)
    adj = jnp.maximum(adj, jnp.eye(N, dtype=jnp.float32))    # self-loops: no zero in-degree

    # deterministic synthetic parameters (DGL GATConv shapes)
    params = {
        # layer 0: fc (input_dim -> heads*F0), attn_l/attn_r (heads, F0), bias (heads*F0)
        "w0": 0.1 * jax.random.normal(ks[2], (num_heads, input_dim, F0), dtype=jnp.float32),
        "al0": 0.1 * jax.random.normal(ks[3], (num_heads, F0), dtype=jnp.float32),
        "ar0": 0.1 * jax.random.normal(ks[4], (num_heads, F0), dtype=jnp.float32),
        "b0": jnp.zeros((num_heads, F0), dtype=jnp.float32),
        # layer 1: fc (num_hidden -> 1*n_classes), attn (1, n_classes), bias (n_classes)
        "w1": 0.1 * jax.random.normal(ks[5], (1, num_hidden, n_classes), dtype=jnp.float32),
        "al1": 0.1 * jax.random.normal(ks[6], (1, n_classes), dtype=jnp.float32),
        "ar1": 0.1 * jax.random.normal(ks[7], (1, n_classes), dtype=jnp.float32),
        "b1": jnp.zeros((1, n_classes), dtype=jnp.float32),
    }

    out = jax.jit(gat_full_dgl_forward)(x, adj, params)
    out = jax.block_until_ready(out)
    assert out.shape == (N, n_classes), out.shape
    assert bool(jnp.all(jnp.isfinite(out)))
    print("KERNEL_OK")
</pallas_src>

<mosaic_0001>
module attributes {stable_mosaic.version = 11 : i64} {
  func.func @gat_fused_kernel(%arg0: memref<64x16xbf16, #tpu.memory_space<vmem>>, %arg1: memref<64x64xi8, #tpu.memory_space<vmem>>, %arg2: memref<16x72xbf16, #tpu.memory_space<vmem>>, %arg3: memref<8x16xbf16, #tpu.memory_space<vmem>>, %arg4: memref<1x64xf32, #tpu.memory_space<vmem>>, %arg5: memref<64x5xbf16, #tpu.memory_space<vmem>>, %arg6: memref<1x64xbf16, #tpu.memory_space<vmem>>, %arg7: memref<1x4xf32, #tpu.memory_space<vmem>>, %arg8: memref<64x4xf32, #tpu.memory_space<vmem>>) attributes {dimension_semantics = [], scalar_prefetch = 0 : i64, scratch_operands = 0 : i64, tpu.core_type = #tpu.core_type<tc>} {
    %c0 = arith.constant 0 : index
    %c0_0 = arith.constant 0 : index
    %0 = vector.load %arg1[%c0, %c0_0] : memref<64x64xi8, #tpu.memory_space<vmem>>, vector<64x64xi8>
    %1 = arith.sitofp %0 : vector<64x64xi8> to vector<64x64xf32>
    %cst = arith.constant 0.000000e+00 : f32
    %2 = vector.broadcast %cst : f32 to vector<64x64xf32>
    %3 = arith.cmpf ogt, %1, %2 : vector<64x64xf32>
    %cst_1 = arith.constant 0.000000e+00 : f32
    %cst_2 = arith.constant -1.000000e+30 : f32
    %4 = vector.broadcast %cst_1 : f32 to vector<64x64xf32>
    %5 = vector.broadcast %cst_2 : f32 to vector<64x64xf32>
    %6 = arith.select %3, %4, %5 : vector<64x64xi1>, vector<64x64xf32>
    %c0_3 = arith.constant 0 : index
    %c0_4 = arith.constant 0 : index
    %7 = vector.load %arg0[%c0_3, %c0_4] : memref<64x16xbf16, #tpu.memory_space<vmem>>, vector<64x16xbf16>
    %c0_5 = arith.constant 0 : index
    %c0_6 = arith.constant 0 : index
    %8 = vector.load %arg2[%c0_5, %c0_6] : memref<16x72xbf16, #tpu.memory_space<vmem>>, vector<16x72xbf16>
    %cst_7 = arith.constant dense<0.000000e+00> : vector<64x72xf32>
    %9 = tpu.matmul %7, %8, %cst_7 {dimension_numbers = #tpu.dot_dimension_numbers<[1], [0], [0], [1], [0, 0, 1, 1], [], []>} : vector<64x16xbf16>, vector<16x72xbf16>, vector<64x72xf32> -> vector<64x72xf32>
    %10 = vector.extract_strided_slice %9 {offsets = [0, 0], sizes = [64, 64], strides = [1, 1]} : vector<64x72xf32> to vector<64x64xf32>
    %11 = vector.extract_strided_slice %9 {offsets = [0, 64], sizes = [64, 8], strides = [1, 1]} : vector<64x72xf32> to vector<64x8xf32>
    %c0_8 = arith.constant 0 : index
    %c0_9 = arith.constant 0 : index
    %12 = vector.load %arg3[%c0_8, %c0_9] : memref<8x16xbf16, #tpu.memory_space<vmem>>, vector<8x16xbf16>
    %cst_10 = arith.constant dense<0.000000e+00> : vector<8x64xf32>
    %13 = tpu.matmul %12, %7, %cst_10 {dimension_numbers = #tpu.dot_dimension_numbers<[1], [1], [0], [0], [0, 0, 1, 0], [], []>} : vector<8x16xbf16>, vector<64x16xbf16>, vector<8x64xf32> -> vector<8x64xf32>
    %14 = arith.truncf %10 : vector<64x64xf32> to vector<64x64xbf16>
    %15 = vector.extract_strided_slice %11 {offsets = [0, 0], sizes = [64, 1], strides = [1, 1]} : vector<64x8xf32> to vector<64x1xf32>
    %16 = vector.extract_strided_slice %13 {offsets = [0, 0], sizes = [1, 64], strides = [1, 1]} : vector<8x64xf32> to vector<1x64xf32>
    %17 = vector.broadcast %15 : vector<64x1xf32> to vector<64x64xf32>
    %18 = vector.broadcast %16 : vector<1x64xf32> to vector<64x64xf32>
    %19 = arith.addf %17, %18 : vector<64x64xf32>
    %cst_11 = arith.constant 0.000000e+00 : f32
    %20 = vector.broadcast %cst_11 : f32 to vector<64x64xf32>
    %21 = arith.cmpf ogt, %19, %20 : vector<64x64xf32>
    %cst_12 = arith.constant 2.000000e-01 : f32
    %22 = vector.broadcast %cst_12 : f32 to vector<64x64xf32>
    %23 = arith.mulf %22, %19 : vector<64x64xf32>
    %24 = arith.select %21, %19, %23 : vector<64x64xi1>, vector<64x64xf32>
    %25 = arith.addf %24, %6 : vector<64x64xf32>
    %cst_13 = arith.constant dense<0xFF800000> : vector<64xf32>
    %26 = vector.multi_reduction <maximumf>, %25, %cst_13 [1] : vector<64x64xf32> to vector<64xf32>
    %27 = vector.shape_cast %26 : vector<64xf32> to vector<64x1xf32>
    %28 = vector.broadcast %27 : vector<64x1xf32> to vector<64x64xf32>
    %29 = arith.subf %25, %28 : vector<64x64xf32>
    %30 = math.exp %29 : vector<64x64xf32>
    %cst_14 = arith.constant dense<0.000000e+00> : vector<64xf32>
    %31 = vector.multi_reduction <add>, %30, %cst_14 [1] : vector<64x64xf32> to vector<64xf32>
    %32 = vector.shape_cast %31 : vector<64xf32> to vector<64x1xf32>
    %33 = tpu.reciprocal %32 {approx = true} : vector<64x1xf32> -> vector<64x1xf32>
    %34 = vector.broadcast %33 : vector<64x1xf32> to vector<64x64xf32>
    %35 = arith.mulf %30, %34 : vector<64x64xf32>
    %36 = arith.truncf %35 : vector<64x64xf32> to vector<64x64xbf16>
    %37 = vector.extract_strided_slice %14 {offsets = [0, 0], sizes = [64, 8], strides = [1, 1]} : vector<64x64xbf16> to vector<64x8xbf16>
    %cst_15 = arith.constant dense<0.000000e+00> : vector<64x8xf32>
    %38 = tpu.matmul %36, %37, %cst_15 {dimension_numbers = #tpu.dot_dimension_numbers<[1], [0], [0], [1], [0, 0, 1, 1], [], []>} : vector<64x64xbf16>, vector<64x8xbf16>, vector<64x8xf32> -> vector<64x8xf32>
    %39 = vector.extract_strided_slice %11 {offsets = [0, 1], sizes = [64, 1], strides = [1, 1]} : vector<64x8xf32> to vector<64x1xf32>
    %40 = vector.extract_strided_slice %13 {offsets = [1, 0], sizes = [1, 64], strides = [1, 1]} : vector<8x64xf32> to vector<1x64xf32>
    %41 = vector.broadcast %39 : vector<64x1xf32> to vector<64x64xf32>
    %42 = vector.broadcast %40 : vector<1x64xf32> to vector<64x64xf32>
    %43 = arith.addf %41, %42 : vector<64x64xf32>
    %cst_16 = arith.constant 0.000000e+00 : f32
    %44 = vector.broadcast %cst_16 : f32 to vector<64x64xf32>
    %45 = arith.cmpf ogt, %43, %44 : vector<64x64xf32>
    %cst_17 = arith.constant 2.000000e-01 : f32
    %46 = vector.broadcast %cst_17 : f32 to vector<64x64xf32>
    %47 = arith.mulf %46, %43 : vector<64x64xf32>
    %48 = arith.select %45, %43, %47 : vector<64x64xi1>, vector<64x64xf32>
    %49 = arith.addf %48, %6 : vector<64x64xf32>
    %cst_18 = arith.constant dense<0xFF800000> : vector<64xf32>
    %50 = vector.multi_reduction <maximumf>, %49, %cst_18 [1] : vector<64x64xf32> to vector<64xf32>
    %51 = vector.shape_cast %50 : vector<64xf32> to vector<64x1xf32>
    %52 = vector.broadcast %51 : vector<64x1xf32> to vector<64x64xf32>
    %53 = arith.subf %49, %52 : vector<64x64xf32>
    %54 = math.exp %53 : vector<64x64xf32>
    %cst_19 = arith.constant dense<0.000000e+00> : vector<64xf32>
    %55 = vector.multi_reduction <add>, %54, %cst_19 [1] : vector<64x64xf32> to vector<64xf32>
    %56 = vector.shape_cast %55 : vector<64xf32> to vector<64x1xf32>
    %57 = tpu.reciprocal %56 {approx = true} : vector<64x1xf32> -> vector<64x1xf32>
    %58 = vector.broadcast %57 : vector<64x1xf32> to vector<64x64xf32>
    %59 = arith.mulf %54, %58 : vector<64x64xf32>
    %60 = arith.truncf %59 : vector<64x64xf32> to vector<64x64xbf16>
    %61 = vector.extract_strided_slice %14 {offsets = [0, 8], sizes = [64, 8], strides = [1, 1]} : vector<64x64xbf16> to vector<64x8xbf16>
    %cst_20 = arith.constant dense<0.000000e+00> : vector<64x8xf32>
    %62 = tpu.matmul %60, %61, %cst_20 {dimension_numbers = #tpu.dot_dimension_numbers<[1], [0], [0], [1], [0, 0, 1, 1], [], []>} : vector<64x64xbf16>, vector<64x8xbf16>, vector<64x8xf32> -> vector<64x8xf32>
    %63 = vector.extract_strided_slice %11 {offsets = [0, 2], sizes = [64, 1], strides = [1, 1]} : vector<64x8xf32> to vector<64x1xf32>
    %64 = vector.extract_strided_slice %13 {offsets = [2, 0], sizes = [1, 64], strides = [1, 1]} : vector<8x64xf32> to vector<1x64xf32>
    %65 = vector.broadcast %63 : vector<64x1xf32> to vector<64x64xf32>
    %66 = vector.broadcast %64 : vector<1x64xf32> to vector<64x64xf32>
    %67 = arith.addf %65, %66 : vector<64x64xf32>
    %cst_21 = arith.constant 0.000000e+00 : f32
    %68 = vector.broadcast %cst_21 : f32 to vector<64x64xf32>
    %69 = arith.cmpf ogt, %67, %68 : vector<64x64xf32>
    %cst_22 = arith.constant 2.000000e-01 : f32
    %70 = vector.broadcast %cst_22 : f32 to vector<64x64xf32>
    %71 = arith.mulf %70, %67 : vector<64x64xf32>
    %72 = arith.select %69, %67, %71 : vector<64x64xi1>, vector<64x64xf32>
    %73 = arith.addf %72, %6 : vector<64x64xf32>
    %cst_23 = arith.constant dense<0xFF800000> : vector<64xf32>
    %74 = vector.multi_reduction <maximumf>, %73, %cst_23 [1] : vector<64x64xf32> to vector<64xf32>
    %75 = vector.shape_cast %74 : vector<64xf32> to vector<64x1xf32>
    %76 = vector.broadcast %75 : vector<64x1xf32> to vector<64x64xf32>
    %77 = arith.subf %73, %76 : vector<64x64xf32>
    %78 = math.exp %77 : vector<64x64xf32>
    %cst_24 = arith.constant dense<0.000000e+00> : vector<64xf32>
    %79 = vector.multi_reduction <add>, %78, %cst_24 [1] : vector<64x64xf32> to vector<64xf32>
    %80 = vector.shape_cast %79 : vector<64xf32> to vector<64x1xf32>
    %81 = tpu.reciprocal %80 {approx = true} : vector<64x1xf32> -> vector<64x1xf32>
    %82 = vector.broadcast %81 : vector<64x1xf32> to vector<64x64xf32>
    %83 = arith.mulf %78, %82 : vector<64x64xf32>
    %84 = arith.truncf %83 : vector<64x64xf32> to vector<64x64xbf16>
    %85 = vector.extract_strided_slice %14 {offsets = [0, 16], sizes = [64, 8], strides = [1, 1]} : vector<64x64xbf16> to vector<64x8xbf16>
    %cst_25 = arith.constant dense<0.000000e+00> : vector<64x8xf32>
    %86 = tpu.matmul %84, %85, %cst_25 {dimension_numbers = #tpu.dot_dimension_numbers<[1], [0], [0], [1], [0, 0, 1, 1], [], []>} : vector<64x64xbf16>, vector<64x8xbf16>, vector<64x8xf32> -> vector<64x8xf32>
    %87 = vector.extract_strided_slice %11 {offsets = [0, 3], sizes = [64, 1], strides = [1, 1]} : vector<64x8xf32> to vector<64x1xf32>
    %88 = vector.extract_strided_slice %13 {offsets = [3, 0], sizes = [1, 64], strides = [1, 1]} : vector<8x64xf32> to vector<1x64xf32>
    %89 = vector.broadcast %87 : vector<64x1xf32> to vector<64x64xf32>
    %90 = vector.broadcast %88 : vector<1x64xf32> to vector<64x64xf32>
    %91 = arith.addf %89, %90 : vector<64x64xf32>
    %cst_26 = arith.constant 0.000000e+00 : f32
    %92 = vector.broadcast %cst_26 : f32 to vector<64x64xf32>
    %93 = arith.cmpf ogt, %91, %92 : vector<64x64xf32>
    %cst_27 = arith.constant 2.000000e-01 : f32
    %94 = vector.broadcast %cst_27 : f32 to vector<64x64xf32>
    %95 = arith.mulf %94, %91 : vector<64x64xf32>
    %96 = arith.select %93, %91, %95 : vector<64x64xi1>, vector<64x64xf32>
    %97 = arith.addf %96, %6 : vector<64x64xf32>
    %cst_28 = arith.constant dense<0xFF800000> : vector<64xf32>
    %98 = vector.multi_reduction <maximumf>, %97, %cst_28 [1] : vector<64x64xf32> to vector<64xf32>
    %99 = vector.shape_cast %98 : vector<64xf32> to vector<64x1xf32>
    %100 = vector.broadcast %99 : vector<64x1xf32> to vector<64x64xf32>
    %101 = arith.subf %97, %100 : vector<64x64xf32>
    %102 = math.exp %101 : vector<64x64xf32>
    %cst_29 = arith.constant dense<0.000000e+00> : vector<64xf32>
    %103 = vector.multi_reduction <add>, %102, %cst_29 [1] : vector<64x64xf32> to vector<64xf32>
    %104 = vector.shape_cast %103 : vector<64xf32> to vector<64x1xf32>
    %105 = tpu.reciprocal %104 {approx = true} : vector<64x1xf32> -> vector<64x1xf32>
    %106 = vector.broadcast %105 : vector<64x1xf32> to vector<64x64xf32>
    %107 = arith.mulf %102, %106 : vector<64x64xf32>
    %108 = arith.truncf %107 : vector<64x64xf32> to vector<64x64xbf16>
    %109 = vector.extract_strided_slice %14 {offsets = [0, 24], sizes = [64, 8], strides = [1, 1]} : vector<64x64xbf16> to vector<64x8xbf16>
    %cst_30 = arith.constant dense<0.000000e+00> : vector<64x8xf32>
    %110 = tpu.matmul %108, %109, %cst_30 {dimension_numbers = #tpu.dot_dimension_numbers<[1], [0], [0], [1], [0, 0, 1, 1], [], []>} : vector<64x64xbf16>, vector<64x8xbf16>, vector<64x8xf32> -> vector<64x8xf32>
    %111 = vector.extract_strided_slice %11 {offsets = [0, 4], sizes = [64, 1], strides = [1, 1]} : vector<64x8xf32> to vector<64x1xf32>
    %112 = vector.extract_strided_slice %13 {offsets = [4, 0], sizes = [1, 64], strides = [1, 1]} : vector<8x64xf32> to vector<1x64xf32>
    %113 = vector.broadcast %111 : vector<64x1xf32> to vector<64x64xf32>
    %114 = vector.broadcast %112 : vector<1x64xf32> to vector<64x64xf32>
    %115 = arith.addf %113, %114 : vector<64x64xf32>
    %cst_31 = arith.constant 0.000000e+00 : f32
    %116 = vector.broadcast %cst_31 : f32 to vector<64x64xf32>
    %117 = arith.cmpf ogt, %115, %116 : vector<64x64xf32>
    %cst_32 = arith.constant 2.000000e-01 : f32
    %118 = vector.broadcast %cst_32 : f32 to vector<64x64xf32>
    %119 = arith.mulf %118, %115 : vector<64x64xf32>
    %120 = arith.select %117, %115, %119 : vector<64x64xi1>, vector<64x64xf32>
    %121 = arith.addf %120, %6 : vector<64x64xf32>
    %cst_33 = arith.constant dense<0xFF800000> : vector<64xf32>
    %122 = vector.multi_reduction <maximumf>, %121, %cst_33 [1] : vector<64x64xf32> to vector<64xf32>
    %123 = vector.shape_cast %122 : vector<64xf32> to vector<64x1xf32>
    %124 = vector.broadcast %123 : vector<64x1xf32> to vector<64x64xf32>
    %125 = arith.subf %121, %124 : vector<64x64xf32>
    %126 = math.exp %125 : vector<64x64xf32>
    %cst_34 = arith.constant dense<0.000000e+00> : vector<64xf32>
    %127 = vector.multi_reduction <add>, %126, %cst_34 [1] : vector<64x64xf32> to vector<64xf32>
    %128 = vector.shape_cast %127 : vector<64xf32> to vector<64x1xf32>
    %129 = tpu.reciprocal %128 {approx = true} : vector<64x1xf32> -> vector<64x1xf32>
    %130 = vector.broadcast %129 : vector<64x1xf32> to vector<64x64xf32>
    %131 = arith.mulf %126, %130 : vector<64x64xf32>
    %132 = arith.truncf %131 : vector<64x64xf32> to vector<64x64xbf16>
    %133 = vector.extract_strided_slice %14 {offsets = [0, 32], sizes = [64, 8], strides = [1, 1]} : vector<64x64xbf16> to vector<64x8xbf16>
    %cst_35 = arith.constant dense<0.000000e+00> : vector<64x8xf32>
    %134 = tpu.matmul %132, %133, %cst_35 {dimension_numbers = #tpu.dot_dimension_numbers<[1], [0], [0], [1], [0, 0, 1, 1], [], []>} : vector<64x64xbf16>, vector<64x8xbf16>, vector<64x8xf32> -> vector<64x8xf32>
    %135 = vector.extract_strided_slice %11 {offsets = [0, 5], sizes = [64, 1], strides = [1, 1]} : vector<64x8xf32> to vector<64x1xf32>
    %136 = vector.extract_strided_slice %13 {offsets = [5, 0], sizes = [1, 64], strides = [1, 1]} : vector<8x64xf32> to vector<1x64xf32>
    %137 = vector.broadcast %135 : vector<64x1xf32> to vector<64x64xf32>
    %138 = vector.broadcast %136 : vector<1x64xf32> to vector<64x64xf32>
    %139 = arith.addf %137, %138 : vector<64x64xf32>
    %cst_36 = arith.constant 0.000000e+00 : f32
    %140 = vector.broadcast %cst_36 : f32 to vector<64x64xf32>
    %141 = arith.cmpf ogt, %139, %140 : vector<64x64xf32>
    %cst_37 = arith.constant 2.000000e-01 : f32
    %142 = vector.broadcast %cst_37 : f32 to vector<64x64xf32>
    %143 = arith.mulf %142, %139 : vector<64x64xf32>
    %144 = arith.select %141, %139, %143 : vector<64x64xi1>, vector<64x64xf32>
    %145 = arith.addf %144, %6 : vector<64x64xf32>
    %cst_38 = arith.constant dense<0xFF800000> : vector<64xf32>
    %146 = vector.multi_reduction <maximumf>, %145, %cst_38 [1] : vector<64x64xf32> to vector<64xf32>
    %147 = vector.shape_cast %146 : vector<64xf32> to vector<64x1xf32>
    %148 = vector.broadcast %147 : vector<64x1xf32> to vector<64x64xf32>
    %149 = arith.subf %145, %148 : vector<64x64xf32>
    %150 = math.exp %149 : vector<64x64xf32>
    %cst_39 = arith.constant dense<0.000000e+00> : vector<64xf32>
    %151 = vector.multi_reduction <add>, %150, %cst_39 [1] : vector<64x64xf32> to vector<64xf32>
    %152 = vector.shape_cast %151 : vector<64xf32> to vector<64x1xf32>
    %153 = tpu.reciprocal %152 {approx = true} : vector<64x1xf32> -> vector<64x1xf32>
    %154 = vector.broadcast %153 : vector<64x1xf32> to vector<64x64xf32>
    %155 = arith.mulf %150, %154 : vector<64x64xf32>
    %156 = arith.truncf %155 : vector<64x64xf32> to vector<64x64xbf16>
    %157 = vector.extract_strided_slice %14 {offsets = [0, 40], sizes = [64, 8], strides = [1, 1]} : vector<64x64xbf16> to vector<64x8xbf16>
    %cst_40 = arith.constant dense<0.000000e+00> : vector<64x8xf32>
    %158 = tpu.matmul %156, %157, %cst_40 {dimension_numbers = #tpu.dot_dimension_numbers<[1], [0], [0], [1], [0, 0, 1, 1], [], []>} : vector<64x64xbf16>, vector<64x8xbf16>, vector<64x8xf32> -> vector<64x8xf32>
    %159 = vector.extract_strided_slice %11 {offsets = [0, 6], sizes = [64, 1], strides = [1, 1]} : vector<64x8xf32> to vector<64x1xf32>
    %160 = vector.extract_strided_slice %13 {offsets = [6, 0], sizes = [1, 64], strides = [1, 1]} : vector<8x64xf32> to vector<1x64xf32>
    %161 = vector.broadcast %159 : vector<64x1xf32> to vector<64x64xf32>
    %162 = vector.broadcast %160 : vector<1x64xf32> to vector<64x64xf32>
    %163 = arith.addf %161, %162 : vector<64x64xf32>
    %cst_41 = arith.constant 0.000000e+00 : f32
    %164 = vector.broadcast %cst_41 : f32 to vector<64x64xf32>
    %165 = arith.cmpf ogt, %163, %164 : vector<64x64xf32>
    %cst_42 = arith.constant 2.000000e-01 : f32
    %166 = vector.broadcast %cst_42 : f32 to vector<64x64xf32>
    %167 = arith.mulf %166, %163 : vector<64x64xf32>
    %168 = arith.select %165, %163, %167 : vector<64x64xi1>, vector<64x64xf32>
    %169 = arith.addf %168, %6 : vector<64x64xf32>
    %cst_43 = arith.constant dense<0xFF800000> : vector<64xf32>
    %170 = vector.multi_reduction <maximumf>, %169, %cst_43 [1] : vector<64x64xf32> to vector<64xf32>
    %171 = vector.shape_cast %170 : vector<64xf32> to vector<64x1xf32>
    %172 = vector.broadcast %171 : vector<64x1xf32> to vector<64x64xf32>
    %173 = arith.subf %169, %172 : vector<64x64xf32>
    %174 = math.exp %173 : vector<64x64xf32>
    %cst_44 = arith.constant dense<0.000000e+00> : vector<64xf32>
    %175 = vector.multi_reduction <add>, %174, %cst_44 [1] : vector<64x64xf32> to vector<64xf32>
    %176 = vector.shape_cast %175 : vector<64xf32> to vector<64x1xf32>
    %177 = tpu.reciprocal %176 {approx = true} : vector<64x1xf32> -> vector<64x1xf32>
    %178 = vector.broadcast %177 : vector<64x1xf32> to vector<64x64xf32>
    %179 = arith.mulf %174, %178 : vector<64x64xf32>
    %180 = arith.truncf %179 : vector<64x64xf32> to vector<64x64xbf16>
    %181 = vector.extract_strided_slice %14 {offsets = [0, 48], sizes = [64, 8], strides = [1, 1]} : vector<64x64xbf16> to vector<64x8xbf16>
    %cst_45 = arith.constant dense<0.000000e+00> : vector<64x8xf32>
    %182 = tpu.matmul %180, %181, %cst_45 {dimension_numbers = #tpu.dot_dimension_numbers<[1], [0], [0], [1], [0, 0, 1, 1], [], []>} : vector<64x64xbf16>, vector<64x8xbf16>, vector<64x8xf32> -> vector<64x8xf32>
    %183 = vector.extract_strided_slice %11 {offsets = [0, 7], sizes = [64, 1], strides = [1, 1]} : vector<64x8xf32> to vector<64x1xf32>
    %184 = vector.extract_strided_slice %13 {offsets = [7, 0], sizes = [1, 64], strides = [1, 1]} : vector<8x64xf32> to vector<1x64xf32>
    %185 = vector.broadcast %183 : vector<64x1xf32> to vector<64x64xf32>
    %186 = vector.broadcast %184 : vector<1x64xf32> to vector<64x64xf32>
    %187 = arith.addf %185, %186 : vector<64x64xf32>
    %cst_46 = arith.constant 0.000000e+00 : f32
    %188 = vector.broadcast %cst_46 : f32 to vector<64x64xf32>
    %189 = arith.cmpf ogt, %187, %188 : vector<64x64xf32>
    %cst_47 = arith.constant 2.000000e-01 : f32
    %190 = vector.broadcast %cst_47 : f32 to vector<64x64xf32>
    %191 = arith.mulf %190, %187 : vector<64x64xf32>
    %192 = arith.select %189, %187, %191 : vector<64x64xi1>, vector<64x64xf32>
    %193 = arith.addf %192, %6 : vector<64x64xf32>
    %cst_48 = arith.constant dense<0xFF800000> : vector<64xf32>
    %194 = vector.multi_reduction <maximumf>, %193, %cst_48 [1] : vector<64x64xf32> to vector<64xf32>
    %195 = vector.shape_cast %194 : vector<64xf32> to vector<64x1xf32>
    %196 = vector.broadcast %195 : vector<64x1xf32> to vector<64x64xf32>
    %197 = arith.subf %193, %196 : vector<64x64xf32>
    %198 = math.exp %197 : vector<64x64xf32>
    %cst_49 = arith.constant dense<0.000000e+00> : vector<64xf32>
    %199 = vector.multi_reduction <add>, %198, %cst_49 [1] : vector<64x64xf32> to vector<64xf32>
    %200 = vector.shape_cast %199 : vector<64xf32> to vector<64x1xf32>
    %201 = tpu.reciprocal %200 {approx = true} : vector<64x1xf32> -> vector<64x1xf32>
    %202 = vector.broadcast %201 : vector<64x1xf32> to vector<64x64xf32>
    %203 = arith.mulf %198, %202 : vector<64x64xf32>
    %204 = arith.truncf %203 : vector<64x64xf32> to vector<64x64xbf16>
    %205 = vector.extract_strided_slice %14 {offsets = [0, 56], sizes = [64, 8], strides = [1, 1]} : vector<64x64xbf16> to vector<64x8xbf16>
    %cst_50 = arith.constant dense<0.000000e+00> : vector<64x8xf32>
    %206 = tpu.matmul %204, %205, %cst_50 {dimension_numbers = #tpu.dot_dimension_numbers<[1], [0], [0], [1], [0, 0, 1, 1], [], []>} : vector<64x64xbf16>, vector<64x8xbf16>, vector<64x8xf32> -> vector<64x8xf32>
    %207 = tpu.concatenate %38, %62, %86, %110, %134, %158, %182, %206 in 1 : vector<64x8xf32>, vector<64x8xf32>, vector<64x8xf32>, vector<64x8xf32>, vector<64x8xf32>, vector<64x8xf32>, vector<64x8xf32>, vector<64x8xf32> -> vector<64x64xf32>
    %c0_51 = arith.constant 0 : index
    %c0_52 = arith.constant 0 : index
    %208 = vector.load %arg4[%c0_51, %c0_52] : memref<1x64xf32, #tpu.memory_space<vmem>>, vector<1x64xf32>
    %209 = vector.broadcast %208 : vector<1x64xf32> to vector<64x64xf32>
    %210 = arith.addf %207, %209 : vector<64x64xf32>
    %cst_53 = arith.constant 0.000000e+00 : f32
    %211 = vector.broadcast %cst_53 : f32 to vector<64x64xf32>
    %212 = arith.cmpf ogt, %210, %211 : vector<64x64xf32>
    %cst_54 = arith.constant 0.000000e+00 : f32
    %213 = vector.broadcast %cst_54 : f32 to vector<64x64xf32>
    %214 = arith.minimumf %210, %213 : vector<64x64xf32>
    %215 = math.exp %214 : vector<64x64xf32>
    %cst_55 = arith.constant 1.000000e+00 : f32
    %216 = vector.broadcast %cst_55 : f32 to vector<64x64xf32>
    %217 = arith.subf %215, %216 : vector<64x64xf32>
    %218 = arith.select %212, %210, %217 : vector<64x64xi1>, vector<64x64xf32>
    %cst_56 = arith.constant 0.000000e+00 : f32
    %219 = vector.broadcast %cst_56 : f32 to vector<64x64xf32>
    %220 = arith.cmpf ogt, %218, %219 : vector<64x64xf32>
    %cst_57 = arith.constant 0.000000e+00 : f32
    %221 = vector.broadcast %cst_57 : f32 to vector<64x64xf32>
    %222 = arith.minimumf %218, %221 : vector<64x64xf32>
    %223 = math.exp %222 : vector<64x64xf32>
    %cst_58 = arith.constant 1.000000e+00 : f32
    %224 = vector.broadcast %cst_58 : f32 to vector<64x64xf32>
    %225 = arith.subf %223, %224 : vector<64x64xf32>
    %226 = arith.select %220, %218, %225 : vector<64x64xi1>, vector<64x64xf32>
    %227 = arith.truncf %226 : vector<64x64xf32> to vector<64x64xbf16>
    %c0_59 = arith.constant 0 : index
    %c0_60 = arith.constant 0 : index
    %228 = vector.load %arg5[%c0_59, %c0_60] : memref<64x5xbf16, #tpu.memory_space<vmem>>, vector<64x5xbf16>
    %cst_61 = arith.constant dense<0.000000e+00> : vector<64x5xf32>
    %229 = tpu.matmul %227, %228, %cst_61 {dimension_numbers = #tpu.dot_dimension_numbers<[1], [0], [0], [1], [0, 0, 1, 1], [], []>} : vector<64x64xbf16>, vector<64x5xbf16>, vector<64x5xf32> -> vector<64x5xf32>
    %230 = vector.extract_strided_slice %229 {offsets = [0, 0], sizes = [64, 4], strides = [1, 1]} : vector<64x5xf32> to vector<64x4xf32>
    %231 = vector.extract_strided_slice %229 {offsets = [0, 4], sizes = [64, 1], strides = [1, 1]} : vector<64x5xf32> to vector<64x1xf32>
    %c0_62 = arith.constant 0 : index
    %c0_63 = arith.constant 0 : index
    %232 = vector.load %arg6[%c0_62, %c0_63] : memref<1x64xbf16, #tpu.memory_space<vmem>>, vector<1x64xbf16>
    %cst_64 = arith.constant dense<0.000000e+00> : vector<1x64xf32>
    %233 = tpu.matmul %232, %227, %cst_64 {dimension_numbers = #tpu.dot_dimension_numbers<[1], [1], [0], [0], [0, 0, 1, 0], [], []>} : vector<1x64xbf16>, vector<64x64xbf16>, vector<1x64xf32> -> vector<1x64xf32>
    %234 = vector.broadcast %231 : vector<64x1xf32> to vector<64x64xf32>
    %235 = vector.broadcast %233 : vector<1x64xf32> to vector<64x64xf32>
    %236 = arith.addf %234, %235 : vector<64x64xf32>
    %cst_65 = arith.constant 0.000000e+00 : f32
    %237 = vector.broadcast %cst_65 : f32 to vector<64x64xf32>
    %238 = arith.cmpf ogt, %236, %237 : vector<64x64xf32>
    %cst_66 = arith.constant 2.000000e-01 : f32
    %239 = vector.broadcast %cst_66 : f32 to vector<64x64xf32>
    %240 = arith.mulf %239, %236 : vector<64x64xf32>
    %241 = arith.select %238, %236, %240 : vector<64x64xi1>, vector<64x64xf32>
    %242 = arith.addf %241, %6 : vector<64x64xf32>
    %cst_67 = arith.constant dense<0xFF800000> : vector<64xf32>
    %243 = vector.multi_reduction <maximumf>, %242, %cst_67 [1] : vector<64x64xf32> to vector<64xf32>
    %244 = vector.shape_cast %243 : vector<64xf32> to vector<64x1xf32>
    %245 = vector.broadcast %244 : vector<64x1xf32> to vector<64x64xf32>
    %246 = arith.subf %242, %245 : vector<64x64xf32>
    %247 = math.exp %246 : vector<64x64xf32>
    %cst_68 = arith.constant dense<0.000000e+00> : vector<64xf32>
    %248 = vector.multi_reduction <add>, %247, %cst_68 [1] : vector<64x64xf32> to vector<64xf32>
    %249 = vector.shape_cast %248 : vector<64xf32> to vector<64x1xf32>
    %250 = tpu.reciprocal %249 {approx = true} : vector<64x1xf32> -> vector<64x1xf32>
    %251 = vector.broadcast %250 : vector<64x1xf32> to vector<64x64xf32>
    %252 = arith.mulf %247, %251 : vector<64x64xf32>
    %253 = arith.truncf %252 : vector<64x64xf32> to vector<64x64xbf16>
    %254 = arith.truncf %230 : vector<64x4xf32> to vector<64x4xbf16>
    %cst_69 = arith.constant dense<0.000000e+00> : vector<64x4xf32>
    %255 = tpu.matmul %253, %254, %cst_69 {dimension_numbers = #tpu.dot_dimension_numbers<[1], [0], [0], [1], [0, 0, 1, 1], [], []>} : vector<64x64xbf16>, vector<64x4xbf16>, vector<64x4xf32> -> vector<64x4xf32>
    %c0_70 = arith.constant 0 : index
    %c0_71 = arith.constant 0 : index
    %256 = vector.load %arg7[%c0_70, %c0_71] : memref<1x4xf32, #tpu.memory_space<vmem>>, vector<1x4xf32>
    %257 = vector.broadcast %256 : vector<1x4xf32> to vector<64x4xf32>
    %258 = arith.addf %255, %257 : vector<64x4xf32>
    %c0_72 = arith.constant 0 : index
    %c0_73 = arith.constant 0 : index
    %259 = vector.load %arg8[%c0_72, %c0_73] : memref<64x4xf32, #tpu.memory_space<vmem>>, vector<64x4xf32>
    tpu.vector_store %arg8[%c0_72, %c0_73], %258 {strides = array<i32>} : memref<64x4xf32, #tpu.memory_space<vmem>>, vector<64x4xf32>,
    return
  }
}

</mosaic_0001>

<llo_original>
// kernel: gat_full_dgl_forward.1
$region0: #{gat_full_dgl_forward.1}
  #allocation0 [shape = 'u32[]', space=smem, size = 0x4, offset = 0x4, fixed_abs, tag = 'smem constant byte address 0x4 - core index']
  #allocation1 [shape = 'u32[72,128]{1,0:T(1,128)}', space=vmem, size = 0x9000, scoped, tag = 'internal scratch']
  %s0 = inlined_call_operand.vmem [shape: bf16[64,16], index: 0, kind: input, shape index: {}]
  %s1 = inlined_call_operand.vmem [shape: s8[64,64], index: 1, kind: input, shape index: {}]
  %s2 = inlined_call_operand.vmem [shape: bf16[16,72], index: 2, kind: input, shape index: {}]
  %s3 = inlined_call_operand.vmem [shape: bf16[8,16], index: 3, kind: input, shape index: {}]
  %s4 = inlined_call_operand.vmem [shape: f32[1,64], index: 4, kind: input, shape index: {}]
  %s5 = inlined_call_operand.vmem [shape: bf16[64,5], index: 5, kind: input, shape index: {}]
  %s6 = inlined_call_operand.vmem [shape: bf16[1,64], index: 6, kind: input, shape index: {}]
  %s7 = inlined_call_operand.vmem [shape: f32[1,4], index: 7, kind: input, shape index: {}]
  %s8 = inlined_call_operand.vmem [shape: f32[64,4], index: 8, kind: output, shape index: {}]
  %s9 = sld [smem:[#allocation0]]
  $region42: #{gat_full_dgl_forward.1} parent=0
    _
  %s11 = ssub.s32 1, %s9
  %s12 = scalar_select 0, %s11, %s9
  // Predicated region
  $region2: #{gat_full_dgl_forward.1} parent=0 // pred_check
    _
  $region3: #{gat_full_dgl_forward.1} parent=0 // pred_check_branch
    %14 = sbr.rel (0) target = $region5
  $region4: #{gat_full_dgl_forward.1} parent=0 // pred_region
    _
  $region5: #{gat_full_dgl_forward.1} parent=0 // pred_fallthru
    _
  // Predicated region
  $region6: #{gat_full_dgl_forward.1} parent=0 // pred_check
    _
  $region7: #{gat_full_dgl_forward.1} parent=0 // pred_check_branch
    %16 = sbr.rel (0) target = $region9
  $region8: #{gat_full_dgl_forward.1} parent=0 // pred_region
    _
  $region9: #{gat_full_dgl_forward.1} parent=0 // pred_fallthru
    _
  // Predicated region
  $region10: #{gat_full_dgl_forward.1} parent=0 // pred_check
    _
  $region11: #{gat_full_dgl_forward.1} parent=0 // pred_check_branch
    %18 = sbr.rel (0) target = $region13
  $region12: #{gat_full_dgl_forward.1} parent=0 // pred_region
    _
  $region13: #{gat_full_dgl_forward.1} parent=0 // pred_fallthru
    _
  // Predicated region
  $region14: #{gat_full_dgl_forward.1} parent=0 // pred_check
    _
  $region15: #{gat_full_dgl_forward.1} parent=0 // pred_check_branch
    %20 = sbr.rel (0) target = $region17
  $region16: #{gat_full_dgl_forward.1} parent=0 // pred_region
    _
  $region17: #{gat_full_dgl_forward.1} parent=0 // pred_fallthru
    _
  // Predicated region
  $region18: #{gat_full_dgl_forward.1} parent=0 // pred_check
    _
  $region19: #{gat_full_dgl_forward.1} parent=0 // pred_check_branch
    %22 = sbr.rel (0) target = $region21
  $region20: #{gat_full_dgl_forward.1} parent=0 // pred_region
    _
  $region21: #{gat_full_dgl_forward.1} parent=0 // pred_fallthru
    _
  // Predicated region
  $region22: #{gat_full_dgl_forward.1} parent=0 // pred_check
    _
  $region23: #{gat_full_dgl_forward.1} parent=0 // pred_check_branch
    %24 = sbr.rel (0) target = $region25
  $region24: #{gat_full_dgl_forward.1} parent=0 // pred_region
    _
  $region25: #{gat_full_dgl_forward.1} parent=0 // pred_fallthru
    _
  // Predicated region
  $region26: #{gat_full_dgl_forward.1} parent=0 // pred_check
    _
  $region27: #{gat_full_dgl_forward.1} parent=0 // pred_check_branch
    %26 = sbr.rel (0) target = $region29
  $region28: #{gat_full_dgl_forward.1} parent=0 // pred_region
    _
  $region29: #{gat_full_dgl_forward.1} parent=0 // pred_fallthru
    _
  // Predicated region
  $region30: #{gat_full_dgl_forward.1} parent=0 // pred_check
    _
  $region31: #{gat_full_dgl_forward.1} parent=0 // pred_check_branch
    %28 = sbr.rel (0) target = $region33
  $region32: #{gat_full_dgl_forward.1} parent=0 // pred_region
    _
  $region33: #{gat_full_dgl_forward.1} parent=0 // pred_fallthru
    _
  %v30 = vld [vmem:[%s1] sm:$0xff]
  %v31 = vld [vmem:[%s1 + $0x8] sm:$0xff]
  %v32 = vunpack.c.0.s8 %v30
  %v33 = vunpack.c.1.s8 %v30
  %v34 = vunpack.c.2.s8 %v30
  %v35 = vunpack.c.3.s8 %v30
  %v36 = vunpack.c.0.s8 %v31
  %v37 = vunpack.c.1.s8 %v31
  %v38 = vunpack.c.2.s8 %v31
  %v39 = vunpack.c.3.s8 %v31
  %v40 = vcvt.s32.f32 %v32
  %v41 = vcvt.s32.f32 %v33
  %v42 = vcvt.s32.f32 %v34
  %v43 = vcvt.s32.f32 %v35
  %v44 = vcvt.s32.f32 %v36
  %v45 = vcvt.s32.f32 %v37
  %v46 = vcvt.s32.f32 %v38
  %v47 = vcvt.s32.f32 %v39
  %vm48 = vcmp.gt.f32.partialorder %v40, 0.0
  %vm49 = vcmp.gt.f32.partialorder %v41, 0.0
  %vm50 = vcmp.gt.f32.partialorder %v42, 0.0
  %vm51 = vcmp.gt.f32.partialorder %v43, 0.0
  %vm52 = vcmp.gt.f32.partialorder %v44, 0.0
  %vm53 = vcmp.gt.f32.partialorder %v45, 0.0
  %vm54 = vcmp.gt.f32.partialorder %v46, 0.0
  %vm55 = vcmp.gt.f32.partialorder %v47, 0.0
  %v56 = vsel %vm48, 0.0, -1e+30
  %v57 = vsel %vm49, 0.0, -1e+30
  %v58 = vsel %vm50, 0.0, -1e+30
  %v59 = vsel %vm51, 0.0, -1e+30
  %v60 = vsel %vm52, 0.0, -1e+30
  %v61 = vsel %vm53, 0.0, -1e+30
  %v62 = vsel %vm54, 0.0, -1e+30
  %v63 = vsel %vm55, 0.0, -1e+30
  %v64 = vld [vmem:[%s0] sm:$0xf]
  %v65 = vld [vmem:[%s0 + $0x4] sm:$0xf]
  %v66 = vld [vmem:[%s0 + $0x8] sm:$0xf]
  %v67 = vld [vmem:[%s0 + $0xc] sm:$0xf]
  %v68 = vld [vmem:[%s0 + $0x10] sm:$0xf]
  %v69 = vld [vmem:[%s0 + $0x14] sm:$0xf]
  %v70 = vld [vmem:[%s0 + $0x18] sm:$0xf]
  %v71 = vld [vmem:[%s0 + $0x1c] sm:$0xf]
  %v72 = vld [vmem:[%s2] sm:$0xf]
  %v73 = vld [vmem:[%s2 + $0x4] sm:$0xf]
  %v82 = vunpack.c.l.b16 %v64
  %v83 = vunpack.c.l.b16 %v65
  %v84 = vunpack.c.l.b16 %v66
  %v85 = vunpack.c.l.b16 %v67
  %v86 = vunpack.c.l.b16 %v68
  %v87 = vunpack.c.l.b16 %v69
  %v88 = vunpack.c.l.b16 %v70
  %v89 = vunpack.c.l.b16 %v71
  %v90 = vpack.c.b16 %v83, %v82
  %v91 = vpack.c.b16 %v85, %v84
  %v92 = vpack.c.b16 %v87, %v86
  %v93 = vpack.c.b16 %v89, %v88
  %v96 = vunpack.c.l.b16 %v72
  %v97 = vunpack.c.l.b16 %v73
  %v98 = vpack.c.b16 %v97, %v96
  %vm100 = vcmask 130048
  %v102 = vsel %vm100, %v90, 0
  %v105 = vsel %vm100, %v91, 0
  %v108 = vsel %vm100, %v92, 0
  %v111 = vsel %vm100, %v93, 0
  %113 = vmatpush.bf16.msra.mxu0 0
  %114 = vmatpush.bf16.msra.mxu0 0
  %115 = vmatpush.bf16.msra.mxu0 0
  %116 = vmatpush.bf16.msra.mxu0 0
  %117 = vmatpush.bf16.msra.mxu0 0
  %118 = vmatpush.bf16.msra.mxu0 0
  %119 = vmatpush.bf16.msra.mxu0 0
  %120 = vmatpush.bf16.msra.mxu0 %v98
  %121 = vmatmul.bf16.gmra.mxu0 %v102
  %v122 = vpop.f32.mrf.mxu0
  %v123 = vadd.f32 0.0, %v122
  %v124 = vpop.f32.mrf.mxu0
  %v125 = vadd.f32 0.0, %v124
  %126 = vmatmul.bf16.gmra.mxu0 %v105
  %v127 = vpop.f32.mrf.mxu0
  %v128 = vadd.f32 0.0, %v127
  %v129 = vpop.f32.mrf.mxu0
  %v130 = vadd.f32 0.0, %v129
  %131 = vmatmul.bf16.gmra.mxu0 %v108
  %v132 = vpop.f32.mrf.mxu0
  %v133 = vadd.f32 0.0, %v132
  %v134 = vpop.f32.mrf.mxu0
  %v135 = vadd.f32 0.0, %v134
  %136 = vmatmul.bf16.gmra.mxu0 %v111
  %v137 = vpop.f32.mrf.mxu0
  %v138 = vadd.f32 0.0, %v137
  %v139 = vpop.f32.mrf.mxu0
  %v140 = vadd.f32 0.0, %v139
  %141 = vdwg.mxu0
  %v142 = vld [vmem:[%s3] sm:$0xf]
  %v144 = vsel %vm100, %v142, 0
  %146 = vmatpush.bf16.xpose.msra.mxu0 0
  %147 = vmatpush.bf16.xpose.msra.mxu0 0
  %148 = vmatpush.bf16.xpose.msra.mxu0 0
  %149 = vmatpush.bf16.xpose.msra.mxu0 0
  %150 = vmatpush.bf16.xpose.msra.mxu0 %v111
  %151 = vmatpush.bf16.xpose.msra.mxu0 %v108
  %152 = vmatpush.bf16.xpose.msra.mxu0 %v105
  %153 = vmatpush.bf16.xpose.msra.mxu0 %v102
  %154 = vmatmul.bf16.gmra.mxu0 %v144
  %v155 = vpop.f32.mrf.mxu0
  %v156 = vadd.f32 0.0, %v155
  %v157 = vpop.f32.mrf.mxu0
  %158 = vdwg.mxu0
  %v159 = vpack.c.bf16 %v123, %v123
  %v160 = vpack.c.bf16 %v125, %v125
  %v161 = vpack.c.bf16 %v128, %v128
  %v162 = vpack.c.bf16 %v130, %v130
  %v163 = vpack.c.bf16 %v133, %v133
  %v164 = vpack.c.bf16 %v135, %v135
  %v165 = vpack.c.bf16 %v138, %v138
  %v166 = vpack.c.bf16 %v140, %v140
  %168 = vset.pattern.permute.xlu0 64
  %169 = vperm.xlu0 %168, %v123
  %v170 = vpop.permute.xlu0 %169
  %173 = vset.pattern.permute.xlu0 64
  %174 = vperm.xlu0 %173, %v125
  %v175 = vpop.permute.xlu0 %174
  %178 = vset.pattern.permute.xlu0 64
  %179 = vperm.xlu0 %178, %v128
  %v180 = vpop.permute.xlu0 %179
  %183 = vset.pattern.permute.xlu0 64
  %184 = vperm.xlu0 %183, %v130
  %v185 = vpop.permute.xlu0 %184
  %188 = vset.pattern.permute.xlu0 64
  %189 = vperm.xlu0 %188, %v133
  %v190 = vpop.permute.xlu0 %189
  %193 = vset.pattern.permute.xlu0 64
  %194 = vperm.xlu0 %193, %v135
  %v195 = vpop.permute.xlu0 %194
  %198 = vset.pattern.permute.xlu0 64
  %199 = vperm.xlu0 %198, %v138
  %v200 = vpop.permute.xlu0 %199
  %203 = vset.pattern.permute.xlu0 64
  %204 = vperm.xlu0 %203, %v140
  %v205 = vpop.permute.xlu0 %204
  %v207 = vperm.slane %v156, 0
  %v208 = vadd.f32 %v170, %v207
  %v209 = vadd.f32 %v175, %v207
  %v210 = vadd.f32 %v180, %v207
  %v211 = vadd.f32 %v185, %v207
  %v212 = vadd.f32 %v190, %v207
  %v213 = vadd.f32 %v195, %v207
  %v214 = vadd.f32 %v200, %v207
  %v215 = vadd.f32 %v205, %v207
  %vm216 = vcmp.gt.f32.partialorder %v208, 0.0
  %vm217 = vcmp.gt.f32.partialorder %v209, 0.0
  %vm218 = vcmp.gt.f32.partialorder %v210, 0.0
  %vm219 = vcmp.gt.f32.partialorder %v211, 0.0
  %vm220 = vcmp.gt.f32.partialorder %v212, 0.0
  %vm221 = vcmp.gt.f32.partialorder %v213, 0.0
  %vm222 = vcmp.gt.f32.partialorder %v214, 0.0
  %vm223 = vcmp.gt.f32.partialorder %v215, 0.0
  %v224 = vmul.f32 %v208, 0.2
  %v225 = vmul.f32 %v209, 0.2
  %v226 = vmul.f32 %v210, 0.2
  %v227 = vmul.f32 %v211, 0.2
  %v228 = vmul.f32 %v212, 0.2
  %v229 = vmul.f32 %v213, 0.2
  %v230 = vmul.f32 %v214, 0.2
  %v231 = vmul.f32 %v215, 0.2
  %v232 = vsel %vm216, %v208, %v224
  %v233 = vsel %vm217, %v209, %v225
  %v234 = vsel %vm218, %v210, %v226
  %v235 = vsel %vm219, %v211, %v227
  %v236 = vsel %vm220, %v212, %v228
  %v237 = vsel %vm221, %v213, %v229
  %v238 = vsel %vm222, %v214, %v230
  %v239 = vsel %vm223, %v215, %v231
  %v240 = vadd.f32 %v232, %v56
  %v241 = vadd.f32 %v233, %v57
  %v242 = vadd.f32 %v234, %v58
  %v243 = vadd.f32 %v235, %v59
  %v244 = vadd.f32 %v236, %v60
  %v245 = vadd.f32 %v237, %v61
  %v246 = vadd.f32 %v238, %v62
  %v247 = vadd.f32 %v239, %v63
  %vm248 = vcmask 523264
  %v249 = vsel %vm248, %v240, -inf
  %250 = vmax.xlane.f32.xlu0 %v249
  %v251 = vpop.xlane.xlu0 %250
  %v252 = vsel %vm248, %v241, -inf
  %253 = vmax.xlane.f32.xlu0 %v252
  %v254 = vpop.xlane.xlu0 %253
  %v255 = vsel %vm248, %v242, -inf
  %256 = vmax.xlane.f32.xlu0 %v255
  %v257 = vpop.xlane.xlu0 %256
  %v258 = vsel %vm248, %v243, -inf
  %259 = vmax.xlane.f32.xlu0 %v258
  %v260 = vpop.xlane.xlu0 %259
  %v261 = vsel %vm248, %v244, -inf
  %262 = vmax.xlane.f32.xlu0 %v261
  %v263 = vpop.xlane.xlu0 %262
  %v264 = vsel %vm248, %v245, -inf
  %265 = vmax.xlane.f32.xlu0 %v264
  %v266 = vpop.xlane.xlu0 %265
  %v267 = vsel %vm248, %v246, -inf
  %268 = vmax.xlane.f32.xlu0 %v267
  %v269 = vpop.xlane.xlu0 %268
  %v270 = vsel %vm248, %v247, -inf
  %271 = vmax.xlane.f32.xlu0 %v270
  %v272 = vpop.xlane.xlu0 %271
  %v273 = vsub.f32 %v240, %v251
  %v274 = vsub.f32 %v241, %v254
  %v275 = vsub.f32 %v242, %v257
  %v276 = vsub.f32 %v243, %v260
  %v277 = vsub.f32 %v244, %v263
  %v278 = vsub.f32 %v245, %v266
  %v279 = vsub.f32 %v246, %v269
  %v280 = vsub.f32 %v247, %v272
  %v281 = vmul.f32 %v273, 1.442695
  %v282 = vpow.pop %v281
  %v283 = vmul.f32 %v274, 1.442695
  %v284 = vpow.pop %v283
  %v285 = vmul.f32 %v275, 1.442695
  %v286 = vpow.pop %v285
  %v287 = vmul.f32 %v276, 1.442695
  %v288 = vpow.pop %v287
  %v289 = vmul.f32 %v277, 1.442695
  %v290 = vpow.pop %v289
  %v291 = vmul.f32 %v278, 1.442695
  %v292 = vpow.pop %v291
  %v293 = vmul.f32 %v279, 1.442695
  %v294 = vpow.pop %v293
  %v295 = vmul.f32 %v280, 1.442695
  %v296 = vpow.pop %v295
  %v297 = vsel %vm248, %v282, 0.0
  %298 = vadd.xlane.f32.xlu0 %v297
  %v299 = vpop.xlane.xlu0 %298
  %v300 = vsel %vm248, %v284, 0.0
  %301 = vadd.xlane.f32.xlu0 %v300
  %v302 = vpop.xlane.xlu0 %301
  %v303 = vsel %vm248, %v286, 0.0
  %304 = vadd.xlane.f32.xlu0 %v303
  %v305 = vpop.xlane.xlu0 %304
  %v306 = vsel %vm248, %v288, 0.0
  %307 = vadd.xlane.f32.xlu0 %v306
  %v308 = vpop.xlane.xlu0 %307
  %v309 = vsel %vm248, %v290, 0.0
  %310 = vadd.xlane.f32.xlu0 %v309
  %v311 = vpop.xlane.xlu0 %310
  %v312 = vsel %vm248, %v292, 0.0
  %313 = vadd.xlane.f32.xlu0 %v312
  %v314 = vpop.xlane.xlu0 %313
  %v315 = vsel %vm248, %v294, 0.0
  %316 = vadd.xlane.f32.xlu0 %v315
  %v317 = vpop.xlane.xlu0 %316
  %v318 = vsel %vm248, %v296, 0.0
  %319 = vadd.xlane.f32.xlu0 %v318
  %v320 = vpop.xlane.xlu0 %319
  %v321 = vrcp.pop %v299
  %v322 = vrcp.pop %v302
  %v323 = vrcp.pop %v305
  %v324 = vrcp.pop %v308
  %v325 = vrcp.pop %v311
  %v326 = vrcp.pop %v314
  %v327 = vrcp.pop %v317
  %v328 = vrcp.pop %v320
  %v329 = vmul.f32 %v282, %v321
  %v330 = vmul.f32 %v284, %v322
  %v331 = vmul.f32 %v286, %v323
  %v332 = vmul.f32 %v288, %v324
  %v333 = vmul.f32 %v290, %v325
  %v334 = vmul.f32 %v292, %v326
  %v335 = vmul.f32 %v294, %v327
  %v336 = vmul.f32 %v296, %v328
  %v337 = vpack.c.bf16 %v330, %v329
  %v338 = vpack.c.bf16 %v332, %v331
  %v339 = vpack.c.bf16 %v334, %v333
  %v340 = vpack.c.bf16 %v336, %v335
  %v349 = vunpack.c.l.b16 %v159
  %v350 = vunpack.c.l.b16 %v160
  %v351 = vunpack.c.l.b16 %v161
  %v352 = vunpack.c.l.b16 %v162
  %v353 = vunpack.c.l.b16 %v163
  %v354 = vunpack.c.l.b16 %v164
  %v355 = vunpack.c.l.b16 %v165
  %v356 = vunpack.c.l.b16 %v166
  %v357 = vpack.c.b16 %v350, %v349
  %v358 = vpack.c.b16 %v352, %v351
  %v359 = vpack.c.b16 %v354, %v353
  %v360 = vpack.c.b16 %v356, %v355
  %v366 = vsel %vm248, %v337, 0
  %v369 = vsel %vm248, %v338, 0
  %v372 = vsel %vm248, %v339, 0
  %v375 = vsel %vm248, %v340, 0
  %377 = vmatpush.bf16.msra.mxu0 0
  %378 = vmatpush.bf16.msra.mxu0 0
  %379 = vmatpush.bf16.msra.mxu0 0
  %380 = vmatpush.bf16.msra.mxu0 0
  %381 = vmatpush.bf16.msra.mxu0 %v360
  %382 = vmatpush.bf16.msra.mxu0 %v359
  %383 = vmatpush.bf16.msra.mxu0 %v358
  %384 = vmatpush.bf16.msra.mxu0 %v357
  %385 = vmatmul.bf16.gmra.mxu0 %v366
  %v386 = vpop.f32.mrf.mxu0
  %v387 = vadd.f32 0.0, %v386
  %v388 = vpop.f32.mrf.mxu0
  %v389 = vadd.f32 0.0, %v388
  %390 = vmatmul.bf16.gmra.mxu0 %v369
  %v391 = vpop.f32.mrf.mxu0
  %v392 = vadd.f32 0.0, %v391
  %v393 = vpop.f32.mrf.mxu0
  %v394 = vadd.f32 0.0, %v393
  %395 = vmatmul.bf16.gmra.mxu0 %v372
  %v396 = vpop.f32.mrf.mxu0
  %v397 = vadd.f32 0.0, %v396
  %v398 = vpop.f32.mrf.mxu0
  %v399 = vadd.f32 0.0, %v398
  %400 = vmatmul.bf16.gmra.mxu0 %v375
  %v401 = vpop.f32.mrf.mxu0
  %v402 = vadd.f32 0.0, %v401
  %v403 = vpop.f32.mrf.mxu0
  %v404 = vadd.f32 0.0, %v403
  %405 = vdwg.mxu0
  %406 = vset.pattern.permute.xlu0 65
  %407 = vperm.xlu0 %406, %v123
  %v408 = vpop.permute.xlu0 %407
  %410 = vset.pattern.permute.xlu0 65
  %411 = vperm.xlu0 %410, %v125
  %v412 = vpop.permute.xlu0 %411
  %414 = vset.pattern.permute.xlu0 65
  %415 = vperm.xlu0 %414, %v128
  %v416 = vpop.permute.xlu0 %415
  %418 = vset.pattern.permute.xlu0 65
  %419 = vperm.xlu0 %418, %v130
  %v420 = vpop.permute.xlu0 %419
  %422 = vset.pattern.permute.xlu0 65
  %423 = vperm.xlu0 %422, %v133
  %v424 = vpop.permute.xlu0 %423
  %426 = vset.pattern.permute.xlu0 65
  %427 = vperm.xlu0 %426, %v135
  %v428 = vpop.permute.xlu0 %427
  %430 = vset.pattern.permute.xlu0 65
  %431 = vperm.xlu0 %430, %v138
  %v432 = vpop.permute.xlu0 %431
  %434 = vset.pattern.permute.xlu0 65
  %435 = vperm.xlu0 %434, %v140
  %v436 = vpop.permute.xlu0 %435
  %v438 = vperm.slane %v156, 1
  %v439 = vadd.f32 %v408, %v438
  %v440 = vadd.f32 %v412, %v438
  %v441 = vadd.f32 %v416, %v438
  %v442 = vadd.f32 %v420, %v438
  %v443 = vadd.f32 %v424, %v438
  %v444 = vadd.f32 %v428, %v438
  %v445 = vadd.f32 %v432, %v438
  %v446 = vadd.f32 %v436, %v438
  %vm447 = vcmp.gt.f32.partialorder %v439, 0.0
  %vm448 = vcmp.gt.f32.partialorder %v440, 0.0
  %vm449 = vcmp.gt.f32.partialorder %v441, 0.0
  %vm450 = vcmp.gt.f32.partialorder %v442, 0.0
  %vm451 = vcmp.gt.f32.partialorder %v443, 0.0
  %vm452 = vcmp.gt.f32.partialorder %v444, 0.0
  %vm453 = vcmp.gt.f32.partialorder %v445, 0.0
  %vm454 = vcmp.gt.f32.partialorder %v446, 0.0
  %v455 = vmul.f32 %v439, 0.2
  %v456 = vmul.f32 %v440, 0.2
  %v457 = vmul.f32 %v441, 0.2
  %v458 = vmul.f32 %v442, 0.2
  %v459 = vmul.f32 %v443, 0.2
  %v460 = vmul.f32 %v444, 0.2
  %v461 = vmul.f32 %v445, 0.2
  %v462 = vmul.f32 %v446, 0.2
  %v463 = vsel %vm447, %v439, %v455
  %v464 = vsel %vm448, %v440, %v456
  %v465 = vsel %vm449, %v441, %v457
  %v466 = vsel %vm450, %v442, %v458
  %v467 = vsel %vm451, %v443, %v459
  %v468 = vsel %vm452, %v444, %v460
  %v469 = vsel %vm453, %v445, %v461
  %v470 = vsel %vm454, %v446, %v462
  %v471 = vadd.f32 %v463, %v56
  %v472 = vadd.f32 %v464, %v57
  %v473 = vadd.f32 %v465, %v58
  %v474 = vadd.f32 %v466, %v59
  %v475 = vadd.f32 %v467, %v60
  %v476 = vadd.f32 %v468, %v61
  %v477 = vadd.f32 %v469, %v62
  %v478 = vadd.f32 %v470, %v63
  %v479 = vsel %vm248, %v471, -inf
  %480 = vmax.xlane.f32.xlu0 %v479
  %v481 = vpop.xlane.xlu0 %480
  %v482 = vsel %vm248, %v472, -inf
  %483 = vmax.xlane.f32.xlu0 %v482
  %v484 = vpop.xlane.xlu0 %483
  %v485 = vsel %vm248, %v473, -inf
  %486 = vmax.xlane.f32.xlu0 %v485
  %v487 = vpop.xlane.xlu0 %486
  %v488 = vsel %vm248, %v474, -inf
  %489 = vmax.xlane.f32.xlu0 %v488
  %v490 = vpop.xlane.xlu0 %489
  %v491 = vsel %vm248, %v475, -inf
  %492 = vmax.xlane.f32.xlu0 %v491
  %v493 = vpop.xlane.xlu0 %492
  %v494 = vsel %vm248, %v476, -inf
  %495 = vmax.xlane.f32.xlu0 %v494
  %v496 = vpop.xlane.xlu0 %495
  %v497 = vsel %vm248, %v477, -inf
  %498 = vmax.xlane.f32.xlu0 %v497
  %v499 = vpop.xlane.xlu0 %498
  %v500 = vsel %vm248, %v478, -inf
  %501 = vmax.xlane.f32.xlu0 %v500
  %v502 = vpop.xlane.xlu0 %501
  %v503 = vsub.f32 %v471, %v481
  %v504 = vsub.f32 %v472, %v484
  %v505 = vsub.f32 %v473, %v487
  %v506 = vsub.f32 %v474, %v490
  %v507 = vsub.f32 %v475, %v493
  %v508 = vsub.f32 %v476, %v496
  %v509 = vsub.f32 %v477, %v499
  %v510 = vsub.f32 %v478, %v502
  %v511 = vmul.f32 %v503, 1.442695
  %v512 = vpow.pop %v511
  %v513 = vmul.f32 %v504, 1.442695
  %v514 = vpow.pop %v513
  %v515 = vmul.f32 %v505, 1.442695
  %v516 = vpow.pop %v515
  %v517 = vmul.f32 %v506, 1.442695
  %v518 = vpow.pop %v517
  %v519 = vmul.f32 %v507, 1.442695
  %v520 = vpow.pop %v519
  %v521 = vmul.f32 %v508, 1.442695
  %v522 = vpow.pop %v521
  %v523 = vmul.f32 %v509, 1.442695
  %v524 = vpow.pop %v523
  %v525 = vmul.f32 %v510, 1.442695
  %v526 = vpow.pop %v525
  %v527 = vsel %vm248, %v512, 0.0
  %528 = vadd.xlane.f32.xlu0 %v527
  %v529 = vpop.xlane.xlu0 %528
  %v530 = vsel %vm248, %v514, 0.0
  %531 = vadd.xlane.f32.xlu0 %v530
  %v532 = vpop.xlane.xlu0 %531
  %v533 = vsel %vm248, %v516, 0.0
  %534 = vadd.xlane.f32.xlu0 %v533
  %v535 = vpop.xlane.xlu0 %534
  %v536 = vsel %vm248, %v518, 0.0
  %537 = vadd.xlane.f32.xlu0 %v536
  %v538 = vpop.xlane.xlu0 %537
  %v539 = vsel %vm248, %v520, 0.0
  %540 = vadd.xlane.f32.xlu0 %v539
  %v541 = vpop.xlane.xlu0 %540
  %v542 = vsel %vm248, %v522, 0.0
  %543 = vadd.xlane.f32.xlu0 %v542
  %v544 = vpop.xlane.xlu0 %543
  %v545 = vsel %vm248, %v524, 0.0
  %546 = vadd.xlane.f32.xlu0 %v545
  %v547 = vpop.xlane.xlu0 %546
  %v548 = vsel %vm248, %v526, 0.0
  %549 = vadd.xlane.f32.xlu0 %v548
  %v550 = vpop.xlane.xlu0 %549
  %v551 = vrcp.pop %v529
  %v552 = vrcp.pop %v532
  %v553 = vrcp.pop %v535
  %v554 = vrcp.pop %v538
  %v555 = vrcp.pop %v541
  %v556 = vrcp.pop %v544
  %v557 = vrcp.pop %v547
  %v558 = vrcp.pop %v550
  %v559 = vmul.f32 %v512, %v551
  %v560 = vmul.f32 %v514, %v552
  %v561 = vmul.f32 %v516, %v553
  %v562 = vmul.f32 %v518, %v554
  %v563 = vmul.f32 %v520, %v555
  %v564 = vmul.f32 %v522, %v556
  %v565 = vmul.f32 %v524, %v557
  %v566 = vmul.f32 %v526, %v558
  %v567 = vpack.c.bf16 %v560, %v559
  %v568 = vpack.c.bf16 %v562, %v561
  %v569 = vpack.c.bf16 %v564, %v563
  %v570 = vpack.c.bf16 %v566, %v565
  %571 = vrot.lane.b32.xlu0 %v357, 120
  %v572 = vpop.permute.xlu0 %571
  %573 = vrot.lane.b32.xlu0 %v358, 120
  %v574 = vpop.permute.xlu0 %573
  %575 = vrot.lane.b32.xlu0 %v359, 120
  %v576 = vpop.permute.xlu0 %575
  %577 = vrot.lane.b32.xlu0 %v360, 120
  %v578 = vpop.permute.xlu0 %577
  %v584 = vsel %vm248, %v567, 0
  %v587 = vsel %vm248, %v568, 0
  %v590 = vsel %vm248, %v569, 0
  %v593 = vsel %vm248, %v570, 0
  %595 = vmatpush.bf16.msra.mxu0 0
  %596 = vmatpush.bf16.msra.mxu0 0
  %597 = vmatpush.bf16.msra.mxu0 0
  %598 = vmatpush.bf16.msra.mxu0 0
  %599 = vmatpush.bf16.msra.mxu0 %v578
  %600 = vmatpush.bf16.msra.mxu0 %v576
  %601 = vmatpush.bf16.msra.mxu0 %v574
  %602 = vmatpush.bf16.msra.mxu0 %v572
  %603 = vmatmul.bf16.gmra.mxu0 %v584
  %v604 = vpop.f32.mrf.mxu0
  %v605 = vadd.f32 0.0, %v604
  %v606 = vpop.f32.mrf.mxu0
  %v607 = vadd.f32 0.0, %v606
  %608 = vmatmul.bf16.gmra.mxu0 %v587
  %v609 = vpop.f32.mrf.mxu0
  %v610 = vadd.f32 0.0, %v609
  %v611 = vpop.f32.mrf.mxu0
  %v612 = vadd.f32 0.0, %v611
  %613 = vmatmul.bf16.gmra.mxu0 %v590
  %v614 = vpop.f32.mrf.mxu0
  %v615 = vadd.f32 0.0, %v614
  %v616 = vpop.f32.mrf.mxu0
  %v617 = vadd.f32 0.0, %v616
  %618 = vmatmul.bf16.gmra.mxu0 %v593
  %v619 = vpop.f32.mrf.mxu0
  %v620 = vadd.f32 0.0, %v619
  %v621 = vpop.f32.mrf.mxu0
  %v622 = vadd.f32 0.0, %v621
  %623 = vdwg.mxu0
  %624 = vset.pattern.permute.xlu0 66
  %625 = vperm.xlu0 %624, %v123
  %v626 = vpop.permute.xlu0 %625
  %628 = vset.pattern.permute.xlu0 66
  %629 = vperm.xlu0 %628, %v125
  %v630 = vpop.permute.xlu0 %629
  %632 = vset.pattern.permute.xlu0 66
  %633 = vperm.xlu0 %632, %v128
  %v634 = vpop.permute.xlu0 %633
  %636 = vset.pattern.permute.xlu0 66
  %637 = vperm.xlu0 %636, %v130
  %v638 = vpop.permute.xlu0 %637
  %640 = vset.pattern.permute.xlu0 66
  %641 = vperm.xlu0 %640, %v133
  %v642 = vpop.permute.xlu0 %641
  %644 = vset.pattern.permute.xlu0 66
  %645 = vperm.xlu0 %644, %v135
  %v646 = vpop.permute.xlu0 %645
  %648 = vset.pattern.permute.xlu0 66
  %649 = vperm.xlu0 %648, %v138
  %v650 = vpop.permute.xlu0 %649
  %652 = vset.pattern.permute.xlu0 66
  %653 = vperm.xlu0 %652, %v140
  %v654 = vpop.permute.xlu0 %653
  %v656 = vperm.slane %v156, 2
  %v657 = vadd.f32 %v626, %v656
  %v658 = vadd.f32 %v630, %v656
  %v659 = vadd.f32 %v634, %v656
  %v660 = vadd.f32 %v638, %v656
  %v661 = vadd.f32 %v642, %v656
  %v662 = vadd.f32 %v646, %v656
  %v663 = vadd.f32 %v650, %v656
  %v664 = vadd.f32 %v654, %v656
  %vm665 = vcmp.gt.f32.partialorder %v657, 0.0
  %vm666 = vcmp.gt.f32.partialorder %v658, 0.0
  %vm667 = vcmp.gt.f32.partialorder %v659, 0.0
  %vm668 = vcmp.gt.f32.partialorder %v660, 0.0
  %vm669 = vcmp.gt.f32.partialorder %v661, 0.0
  %vm670 = vcmp.gt.f32.partialorder %v662, 0.0
  %vm671 = vcmp.gt.f32.partialorder %v663, 0.0
  %vm672 = vcmp.gt.f32.partialorder %v664, 0.0
  %v673 = vmul.f32 %v657, 0.2
  %v674 = vmul.f32 %v658, 0.2
  %v675 = vmul.f32 %v659, 0.2
  %v676 = vmul.f32 %v660, 0.2
  %v677 = vmul.f32 %v661, 0.2
  %v678 = vmul.f32 %v662, 0.2
  %v679 = vmul.f32 %v663, 0.2
  %v680 = vmul.f32 %v664, 0.2
  %v681 = vsel %vm665, %v657, %v673
  %v682 = vsel %vm666, %v658, %v674
  %v683 = vsel %vm667, %v659, %v675
  %v684 = vsel %vm668, %v660, %v676
  %v685 = vsel %vm669, %v661, %v677
  %v686 = vsel %vm670, %v662, %v678
  %v687 = vsel %vm671, %v663, %v679
  %v688 = vsel %vm672, %v664, %v680
  %v689 = vadd.f32 %v681, %v56
  %v690 = vadd.f32 %v682, %v57
  %v691 = vadd.f32 %v683, %v58
  %v692 = vadd.f32 %v684, %v59
  %v693 = vadd.f32 %v685, %v60
  %v694 = vadd.f32 %v686, %v61
  %v695 = vadd.f32 %v687, %v62
  %v696 = vadd.f32 %v688, %v63
  %v697 = vsel %vm248, %v689, -inf
  %698 = vmax.xlane.f32.xlu0 %v697
  %v699 = vpop.xlane.xlu0 %698
  %v700 = vsel %vm248, %v690, -inf
  %701 = vmax.xlane.f32.xlu0 %v700
  %v702 = vpop.xlane.xlu0 %701
  %v703 = vsel %vm248, %v691, -inf
  %704 = vmax.xlane.f32.xlu0 %v703
  %v705 = vpop.xlane.xlu0 %704
  %v706 = vsel %vm248, %v692, -inf
  %707 = vmax.xlane.f32.xlu0 %v706
  %v708 = vpop.xlane.xlu0 %707
  %v709 = vsel %vm248, %v693, -inf
  %710 = vmax.xlane.f32.xlu0 %v709
  %v711 = vpop.xlane.xlu0 %710
  %v712 = vsel %vm248, %v694, -inf
  %713 = vmax.xlane.f32.xlu0 %v712
  %v714 = vpop.xlane.xlu0 %713
  %v715 = vsel %vm248, %v695, -inf
  %716 = vmax.xlane.f32.xlu0 %v715
  %v717 = vpop.xlane.xlu0 %716
  %v718 = vsel %vm248, %v696, -inf
  %719 = vmax.xlane.f32.xlu0 %v718
  %v720 = vpop.xlane.xlu0 %719
  %v721 = vsub.f32 %v689, %v699
  %v722 = vsub.f32 %v690, %v702
  %v723 = vsub.f32 %v691, %v705
  %v724 = vsub.f32 %v692, %v708
  %v725 = vsub.f32 %v693, %v711
  %v726 = vsub.f32 %v694, %v714
  %v727 = vsub.f32 %v695, %v717
  %v728 = vsub.f32 %v696, %v720
  %v729 = vmul.f32 %v721, 1.442695
  %v730 = vpow.pop %v729
  %v731 = vmul.f32 %v722, 1.442695
  %v732 = vpow.pop %v731
  %v733 = vmul.f32 %v723, 1.442695
  %v734 = vpow.pop %v733
  %v735 = vmul.f32 %v724, 1.442695
  %v736 = vpow.pop %v735
  %v737 = vmul.f32 %v725, 1.442695
  %v738 = vpow.pop %v737
  %v739 = vmul.f32 %v726, 1.442695
  %v740 = vpow.pop %v739
  %v741 = vmul.f32 %v727, 1.442695
  %v742 = vpow.pop %v741
  %v743 = vmul.f32 %v728, 1.442695
  %v744 = vpow.pop %v743
  %v745 = vsel %vm248, %v730, 0.0
  %746 = vadd.xlane.f32.xlu0 %v745
  %v747 = vpop.xlane.xlu0 %746
  %v748 = vsel %vm248, %v732, 0.0
  %749 = vadd.xlane.f32.xlu0 %v748
  %v750 = vpop.xlane.xlu0 %749
  %v751 = vsel %vm248, %v734, 0.0
  %752 = vadd.xlane.f32.xlu0 %v751
  %v753 = vpop.xlane.xlu0 %752
  %v754 = vsel %vm248, %v736, 0.0
  %755 = vadd.xlane.f32.xlu0 %v754
  %v756 = vpop.xlane.xlu0 %755
  %v757 = vsel %vm248, %v738, 0.0
  %758 = vadd.xlane.f32.xlu0 %v757
  %v759 = vpop.xlane.xlu0 %758
  %v760 = vsel %vm248, %v740, 0.0
  %761 = vadd.xlane.f32.xlu0 %v760
  %v762 = vpop.xlane.xlu0 %761
  %v763 = vsel %vm248, %v742, 0.0
  %764 = vadd.xlane.f32.xlu0 %v763
  %v765 = vpop.xlane.xlu0 %764
  %v766 = vsel %vm248, %v744, 0.0
  %767 = vadd.xlane.f32.xlu0 %v766
  %v768 = vpop.xlane.xlu0 %767
  %v769 = vrcp.pop %v747
  %v770 = vrcp.pop %v750
  %v771 = vrcp.pop %v753
  %v772 = vrcp.pop %v756
  %v773 = vrcp.pop %v759
  %v774 = vrcp.pop %v762
  %v775 = vrcp.pop %v765
  %v776 = vrcp.pop %v768
  %v777 = vmul.f32 %v730, %v769
  %v778 = vmul.f32 %v732, %v770
  %v779 = vmul.f32 %v734, %v771
  %v780 = vmul.f32 %v736, %v772
  %v781 = vmul.f32 %v738, %v773
  %v782 = vmul.f32 %v740, %v774
  %v783 = vmul.f32 %v742, %v775
  %v784 = vmul.f32 %v744, %v776
  %v785 = vpack.c.bf16 %v778, %v777
  %v786 = vpack.c.bf16 %v780, %v779
  %v787 = vpack.c.bf16 %v782, %v781
  %v788 = vpack.c.bf16 %v784, %v783
  %789 = vrot.lane.b32.xlu0 %v357, 112
  %v790 = vpop.permute.xlu0 %789
  %791 = vrot.lane.b32.xlu0 %v358, 112
  %v792 = vpop.permute.xlu0 %791
  %793 = vrot.lane.b32.xlu0 %v359, 112
  %v794 = vpop.permute.xlu0 %793
  %795 = vrot.lane.b32.xlu0 %v360, 112
  %v796 = vpop.permute.xlu0 %795
  %v802 = vsel %vm248, %v785, 0
  %v805 = vsel %vm248, %v786, 0
  %v808 = vsel %vm248, %v787, 0
  %v811 = vsel %vm248, %v788, 0
  %813 = vmatpush.bf16.msra.mxu0 0
  %814 = vmatpush.bf16.msra.mxu0 0
  %815 = vmatpush.bf16.msra.mxu0 0
  %816 = vmatpush.bf16.msra.mxu0 0
  %817 = vmatpush.bf16.msra.mxu0 %v796
  %818 = vmatpush.bf16.msra.mxu0 %v794
  %819 = vmatpush.bf16.msra.mxu0 %v792
  %820 = vmatpush.bf16.msra.mxu0 %v790
  %821 = vmatmul.bf16.gmra.mxu0 %v802
  %v822 = vpop.f32.mrf.mxu0
  %v823 = vadd.f32 0.0, %v822
  %v824 = vpop.f32.mrf.mxu0
  %v825 = vadd.f32 0.0, %v824
  %826 = vmatmul.bf16.gmra.mxu0 %v805
  %v827 = vpop.f32.mrf.mxu0
  %v828 = vadd.f32 0.0, %v827
  %v829 = vpop.f32.mrf.mxu0
  %v830 = vadd.f32 0.0, %v829
  %831 = vmatmul.bf16.gmra.mxu0 %v808
  %v832 = vpop.f32.mrf.mxu0
  %v833 = vadd.f32 0.0, %v832
  %v834 = vpop.f32.mrf.mxu0
  %v835 = vadd.f32 0.0, %v834
  %836 = vmatmul.bf16.gmra.mxu0 %v811
  %v837 = vpop.f32.mrf.mxu0
  %v838 = vadd.f32 0.0, %v837
  %v839 = vpop.f32.mrf.mxu0
  %v840 = vadd.f32 0.0, %v839
  %841 = vdwg.mxu0
  %842 = vset.pattern.permute.xlu0 67
  %843 = vperm.xlu0 %842, %v123
  %v844 = vpop.permute.xlu0 %843
  %846 = vset.pattern.permute.xlu0 67
  %847 = vperm.xlu0 %846, %v125
  %v848 = vpop.permute.xlu0 %847
  %850 = vset.pattern.permute.xlu0 67
  %851 = vperm.xlu0 %850, %v128
  %v852 = vpop.permute.xlu0 %851
  %854 = vset.pattern.permute.xlu0 67
  %855 = vperm.xlu0 %854, %v130
  %v856 = vpop.permute.xlu0 %855
  %858 = vset.pattern.permute.xlu0 67
  %859 = vperm.xlu0 %858, %v133
  %v860 = vpop.permute.xlu0 %859
  %862 = vset.pattern.permute.xlu0 67
  %863 = vperm.xlu0 %862, %v135
  %v864 = vpop.permute.xlu0 %863
  %866 = vset.pattern.permute.xlu0 67
  %867 = vperm.xlu0 %866, %v138
  %v868 = vpop.permute.xlu0 %867
  %870 = vset.pattern.permute.xlu0 67
  %871 = vperm.xlu0 %870, %v140
  %v872 = vpop.permute.xlu0 %871
  %v874 = vperm.slane %v156, 3
  %v875 = vadd.f32 %v844, %v874
  %v876 = vadd.f32 %v848, %v874
  %v877 = vadd.f32 %v852, %v874
  %v878 = vadd.f32 %v856, %v874
  %v879 = vadd.f32 %v860, %v874
  %v880 = vadd.f32 %v864, %v874
  %v881 = vadd.f32 %v868, %v874
  %v882 = vadd.f32 %v872, %v874
  %vm883 = vcmp.gt.f32.partialorder %v875, 0.0
  %vm884 = vcmp.gt.f32.partialorder %v876, 0.0
  %vm885 = vcmp.gt.f32.partialorder %v877, 0.0
  %vm886 = vcmp.gt.f32.partialorder %v878, 0.0
  %vm887 = vcmp.gt.f32.partialorder %v879, 0.0
  %vm888 = vcmp.gt.f32.partialorder %v880, 0.0
  %vm889 = vcmp.gt.f32.partialorder %v881, 0.0
  %vm890 = vcmp.gt.f32.partialorder %v882, 0.0
  %v891 = vmul.f32 %v875, 0.2
  %v892 = vmul.f32 %v876, 0.2
  %v893 = vmul.f32 %v877, 0.2
  %v894 = vmul.f32 %v878, 0.2
  %v895 = vmul.f32 %v879, 0.2
  %v896 = vmul.f32 %v880, 0.2
  %v897 = vmul.f32 %v881, 0.2
  %v898 = vmul.f32 %v882, 0.2
  %v899 = vsel %vm883, %v875, %v891
  %v900 = vsel %vm884, %v876, %v892
  %v901 = vsel %vm885, %v877, %v893
  %v902 = vsel %vm886, %v878, %v894
  %v903 = vsel %vm887, %v879, %v895
  %v904 = vsel %vm888, %v880, %v896
  %v905 = vsel %vm889, %v881, %v897
  %v906 = vsel %vm890, %v882, %v898
  %v907 = vadd.f32 %v899, %v56
  %v908 = vadd.f32 %v900, %v57
  %v909 = vadd.f32 %v901, %v58
  %v910 = vadd.f32 %v902, %v59
  %v911 = vadd.f32 %v903, %v60
  %v912 = vadd.f32 %v904, %v61
  %v913 = vadd.f32 %v905, %v62
  %v914 = vadd.f32 %v906, %v63
  %v915 = vsel %vm248, %v907, -inf
  %916 = vmax.xlane.f32.xlu0 %v915
  %v917 = vpop.xlane.xlu0 %916
  %v918 = vsel %vm248, %v908, -inf
  %919 = vmax.xlane.f32.xlu0 %v918
  %v920 = vpop.xlane.xlu0 %919
  %v921 = vsel %vm248, %v909, -inf
  %922 = vmax.xlane.f32.xlu0 %v921
  %v923 = vpop.xlane.xlu0 %922
  %v924 = vsel %vm248, %v910, -inf
  %925 = vmax.xlane.f32.xlu0 %v924
  %v926 = vpop.xlane.xlu0 %925
  %v927 = vsel %vm248, %v911, -inf
  %928 = vmax.xlane.f32.xlu0 %v927
  %v929 = vpop.xlane.xlu0 %928
  %v930 = vsel %vm248, %v912, -inf
  %931 = vmax.xlane.f32.xlu0 %v930
  %v932 = vpop.xlane.xlu0 %931
  %v933 = vsel %vm248, %v913, -inf
  %934 = vmax.xlane.f32.xlu0 %v933
  %v935 = vpop.xlane.xlu0 %934
  %v936 = vsel %vm248, %v914, -inf
  %937 = vmax.xlane.f32.xlu0 %v936
  %v938 = vpop.xlane.xlu0 %937
  %v939 = vsub.f32 %v907, %v917
  %v940 = vsub.f32 %v908, %v920
  %v941 = vsub.f32 %v909, %v923
  %v942 = vsub.f32 %v910, %v926
  %v943 = vsub.f32 %v911, %v929
  %v944 = vsub.f32 %v912, %v932
  %v945 = vsub.f32 %v913, %v935
  %v946 = vsub.f32 %v914, %v938
  %v947 = vmul.f32 %v939, 1.442695
  %v948 = vpow.pop %v947
  %v949 = vmul.f32 %v940, 1.442695
  %v950 = vpow.pop %v949
  %v951 = vmul.f32 %v941, 1.442695
  %v952 = vpow.pop %v951
  %v953 = vmul.f32 %v942, 1.442695
  %v954 = vpow.pop %v953
  %v955 = vmul.f32 %v943, 1.442695
  %v956 = vpow.pop %v955
  %v957 = vmul.f32 %v944, 1.442695
  %v958 = vpow.pop %v957
  %v959 = vmul.f32 %v945, 1.442695
  %v960 = vpow.pop %v959
  %v961 = vmul.f32 %v946, 1.442695
  %v962 = vpow.pop %v961
  %v963 = vsel %vm248, %v948, 0.0
  %964 = vadd.xlane.f32.xlu0 %v963
  %v965 = vpop.xlane.xlu0 %964
  %v966 = vsel %vm248, %v950, 0.0
  %967 = vadd.xlane.f32.xlu0 %v966
  %v968 = vpop.xlane.xlu0 %967
  %v969 = vsel %vm248, %v952, 0.0
  %970 = vadd.xlane.f32.xlu0 %v969
  %v971 = vpop.xlane.xlu0 %970
  %v972 = vsel %vm248, %v954, 0.0
  %973 = vadd.xlane.f32.xlu0 %v972
  %v974 = vpop.xlane.xlu0 %973
  %v975 = vsel %vm248, %v956, 0.0
  %976 = vadd.xlane.f32.xlu0 %v975
  %v977 = vpop.xlane.xlu0 %976
  %v978 = vsel %vm248, %v958, 0.0
  %979 = vadd.xlane.f32.xlu0 %v978
  %v980 = vpop.xlane.xlu0 %979
  %v981 = vsel %vm248, %v960, 0.0
  %982 = vadd.xlane.f32.xlu0 %v981
  %v983 = vpop.xlane.xlu0 %982
  %v984 = vsel %vm248, %v962, 0.0
  %985 = vadd.xlane.f32.xlu0 %v984
  %v986 = vpop.xlane.xlu0 %985
  %v987 = vrcp.pop %v965
  %v988 = vrcp.pop %v968
  %v989 = vrcp.pop %v971
  %v990 = vrcp.pop %v974
  %v991 = vrcp.pop %v977
  %v992 = vrcp.pop %v980
  %v993 = vrcp.pop %v983
  %v994 = vrcp.pop %v986
  %v995 = vmul.f32 %v948, %v987
  %v996 = vmul.f32 %v950, %v988
  %v997 = vmul.f32 %v952, %v989
  %v998 = vmul.f32 %v954, %v990
  %v999 = vmul.f32 %v956, %v991
  %v1000 = vmul.f32 %v958, %v992
  %v1001 = vmul.f32 %v960, %v993
  %v1002 = vmul.f32 %v962, %v994
  %v1003 = vpack.c.bf16 %v996, %v995
  %v1004 = vpack.c.bf16 %v998, %v997
  %v1005 = vpack.c.bf16 %v1000, %v999
  %v1006 = vpack.c.bf16 %v1002, %v1001
  %1007 = vrot.lane.b32.xlu0 %v357, 104
  %v1008 = vpop.permute.xlu0 %1007
  %1009 = vrot.lane.b32.xlu0 %v358, 104
  %v1010 = vpop.permute.xlu0 %1009
  %1011 = vrot.lane.b32.xlu0 %v359, 104
  %v1012 = vpop.permute.xlu0 %1011
  %1013 = vrot.lane.b32.xlu0 %v360, 104
  %v1014 = vpop.permute.xlu0 %1013
  %v1020 = vsel %vm248, %v1003, 0
  %v1023 = vsel %vm248, %v1004, 0
  %v1026 = vsel %vm248, %v1005, 0
  %v1029 = vsel %vm248, %v1006, 0
  %1031 = vmatpush.bf16.msra.mxu0 0
  %1032 = vmatpush.bf16.msra.mxu0 0
  %1033 = vmatpush.bf16.msra.mxu0 0
  %1034 = vmatpush.bf16.msra.mxu0 0
  %1035 = vmatpush.bf16.msra.mxu0 %v1014
  %1036 = vmatpush.bf16.msra.mxu0 %v1012
  %1037 = vmatpush.bf16.msra.mxu0 %v1010
  %1038 = vmatpush.bf16.msra.mxu0 %v1008
  %1039 = vmatmul.bf16.gmra.mxu0 %v1020
  %v1040 = vpop.f32.mrf.mxu0
  %v1041 = vadd.f32 0.0, %v1040
  %v1042 = vpop.f32.mrf.mxu0
  %v1043 = vadd.f32 0.0, %v1042
  %1044 = vmatmul.bf16.gmra.mxu0 %v1023
  %v1045 = vpop.f32.mrf.mxu0
  %v1046 = vadd.f32 0.0, %v1045
  %v1047 = vpop.f32.mrf.mxu0
  %v1048 = vadd.f32 0.0, %v1047
  %1049 = vmatmul.bf16.gmra.mxu0 %v1026
  %v1050 = vpop.f32.mrf.mxu0
  %v1051 = vadd.f32 0.0, %v1050
  %v1052 = vpop.f32.mrf.mxu0
  %v1053 = vadd.f32 0.0, %v1052
  %1054 = vmatmul.bf16.gmra.mxu0 %v1029
  %v1055 = vpop.f32.mrf.mxu0
  %v1056 = vadd.f32 0.0, %v1055
  %v1057 = vpop.f32.mrf.mxu0
  %v1058 = vadd.f32 0.0, %v1057
  %1059 = vdwg.mxu0
  %1060 = vset.pattern.permute.xlu0 68
  %1061 = vperm.xlu0 %1060, %v123
  %v1062 = vpop.permute.xlu0 %1061
  %1064 = vset.pattern.permute.xlu0 68
  %1065 = vperm.xlu0 %1064, %v125
  %v1066 = vpop.permute.xlu0 %1065
  %1068 = vset.pattern.permute.xlu0 68
  %1069 = vperm.xlu0 %1068, %v128
  %v1070 = vpop.permute.xlu0 %1069
  %1072 = vset.pattern.permute.xlu0 68
  %1073 = vperm.xlu0 %1072, %v130
  %v1074 = vpop.permute.xlu0 %1073
  %1076 = vset.pattern.permute.xlu0 68
  %1077 = vperm.xlu0 %1076, %v133
  %v1078 = vpop.permute.xlu0 %1077
  %1080 = vset.pattern.permute.xlu0 68
  %1081 = vperm.xlu0 %1080, %v135
  %v1082 = vpop.permute.xlu0 %1081
  %1084 = vset.pattern.permute.xlu0 68
  %1085 = vperm.xlu0 %1084, %v138
  %v1086 = vpop.permute.xlu0 %1085
  %1088 = vset.pattern.permute.xlu0 68
  %1089 = vperm.xlu0 %1088, %v140
  %v1090 = vpop.permute.xlu0 %1089
  %v1092 = vperm.slane %v156, 4
  %v1093 = vadd.f32 %v1062, %v1092
  %v1094 = vadd.f32 %v1066, %v1092
  %v1095 = vadd.f32 %v1070, %v1092
  %v1096 = vadd.f32 %v1074, %v1092
  %v1097 = vadd.f32 %v1078, %v1092
  %v1098 = vadd.f32 %v1082, %v1092
  %v1099 = vadd.f32 %v1086, %v1092
  %v1100 = vadd.f32 %v1090, %v1092
  %vm1101 = vcmp.gt.f32.partialorder %v1093, 0.0
  %vm1102 = vcmp.gt.f32.partialorder %v1094, 0.0
  %vm1103 = vcmp.gt.f32.partialorder %v1095, 0.0
  %vm1104 = vcmp.gt.f32.partialorder %v1096, 0.0
  %vm1105 = vcmp.gt.f32.partialorder %v1097, 0.0
  %vm1106 = vcmp.gt.f32.partialorder %v1098, 0.0
  %vm1107 = vcmp.gt.f32.partialorder %v1099, 0.0
  %vm1108 = vcmp.gt.f32.partialorder %v1100, 0.0
  %v1109 = vmul.f32 %v1093, 0.2
  %v1110 = vmul.f32 %v1094, 0.2
  %v1111 = vmul.f32 %v1095, 0.2
  %v1112 = vmul.f32 %v1096, 0.2
  %v1113 = vmul.f32 %v1097, 0.2
  %v1114 = vmul.f32 %v1098, 0.2
  %v1115 = vmul.f32 %v1099, 0.2
  %v1116 = vmul.f32 %v1100, 0.2
  %v1117 = vsel %vm1101, %v1093, %v1109
  %v1118 = vsel %vm1102, %v1094, %v1110
  %v1119 = vsel %vm1103, %v1095, %v1111
  %v1120 = vsel %vm1104, %v1096, %v1112
  %v1121 = vsel %vm1105, %v1097, %v1113
  %v1122 = vsel %vm1106, %v1098, %v1114
  %v1123 = vsel %vm1107, %v1099, %v1115
  %v1124 = vsel %vm1108, %v1100, %v1116
  %v1125 = vadd.f32 %v1117, %v56
  %v1126 = vadd.f32 %v1118, %v57
  %v1127 = vadd.f32 %v1119, %v58
  %v1128 = vadd.f32 %v1120, %v59
  %v1129 = vadd.f32 %v1121, %v60
  %v1130 = vadd.f32 %v1122, %v61
  %v1131 = vadd.f32 %v1123, %v62
  %v1132 = vadd.f32 %v1124, %v63
  %v1133 = vsel %vm248, %v1125, -inf
  %1134 = vmax.xlane.f32.xlu0 %v1133
  %v1135 = vpop.xlane.xlu0 %1134
  %v1136 = vsel %vm248, %v1126, -inf
  %1137 = vmax.xlane.f32.xlu0 %v1136
  %v1138 = vpop.xlane.xlu0 %1137
  %v1139 = vsel %vm248, %v1127, -inf
  %1140 = vmax.xlane.f32.xlu0 %v1139
  %v1141 = vpop.xlane.xlu0 %1140
  %v1142 = vsel %vm248, %v1128, -inf
  %1143 = vmax.xlane.f32.xlu0 %v1142
  %v1144 = vpop.xlane.xlu0 %1143
  %v1145 = vsel %vm248, %v1129, -inf
  %1146 = vmax.xlane.f32.xlu0 %v1145
  %v1147 = vpop.xlane.xlu0 %1146
  %v1148 = vsel %vm248, %v1130, -inf
  %1149 = vmax.xlane.f32.xlu0 %v1148
  %v1150 = vpop.xlane.xlu0 %1149
  %v1151 = vsel %vm248, %v1131, -inf
  %1152 = vmax.xlane.f32.xlu0 %v1151
  %v1153 = vpop.xlane.xlu0 %1152
  %v1154 = vsel %vm248, %v1132, -inf
  %1155 = vmax.xlane.f32.xlu0 %v1154
  %v1156 = vpop.xlane.xlu0 %1155
  %v1157 = vsub.f32 %v1125, %v1135
  %v1158 = vsub.f32 %v1126, %v1138
  %v1159 = vsub.f32 %v1127, %v1141
  %v1160 = vsub.f32 %v1128, %v1144
  %v1161 = vsub.f32 %v1129, %v1147
  %v1162 = vsub.f32 %v1130, %v1150
  %v1163 = vsub.f32 %v1131, %v1153
  %v1164 = vsub.f32 %v1132, %v1156
  %v1165 = vmul.f32 %v1157, 1.442695
  %v1166 = vpow.pop %v1165
  %v1167 = vmul.f32 %v1158, 1.442695
  %v1168 = vpow.pop %v1167
  %v1169 = vmul.f32 %v1159, 1.442695
  %v1170 = vpow.pop %v1169
  %v1171 = vmul.f32 %v1160, 1.442695
  %v1172 = vpow.pop %v1171
  %v1173 = vmul.f32 %v1161, 1.442695
  %v1174 = vpow.pop %v1173
  %v1175 = vmul.f32 %v1162, 1.442695
  %v1176 = vpow.pop %v1175
  %v1177 = vmul.f32 %v1163, 1.442695
  %v1178 = vpow.pop %v1177
  %v1179 = vmul.f32 %v1164, 1.442695
  %v1180 = vpow.pop %v1179
  %v1181 = vsel %vm248, %v1166, 0.0
  %1182 = vadd.xlane.f32.xlu0 %v1181
  %v1183 = vpop.xlane.xlu0 %1182
  %v1184 = vsel %vm248, %v1168, 0.0
  %1185 = vadd.xlane.f32.xlu0 %v1184
  %v1186 = vpop.xlane.xlu0 %1185
  %v1187 = vsel %vm248, %v1170, 0.0
  %1188 = vadd.xlane.f32.xlu0 %v1187
  %v1189 = vpop.xlane.xlu0 %1188
  %v1190 = vsel %vm248, %v1172, 0.0
  %1191 = vadd.xlane.f32.xlu0 %v1190
  %v1192 = vpop.xlane.xlu0 %1191
  %v1193 = vsel %vm248, %v1174, 0.0
  %1194 = vadd.xlane.f32.xlu0 %v1193
  %v1195 = vpop.xlane.xlu0 %1194
  %v1196 = vsel %vm248, %v1176, 0.0
  %1197 = vadd.xlane.f32.xlu0 %v1196
  %v1198 = vpop.xlane.xlu0 %1197
  %v1199 = vsel %vm248, %v1178, 0.0
  %1200 = vadd.xlane.f32.xlu0 %v1199
  %v1201 = vpop.xlane.xlu0 %1200
  %v1202 = vsel %vm248, %v1180, 0.0
  %1203 = vadd.xlane.f32.xlu0 %v1202
  %v1204 = vpop.xlane.xlu0 %1203
  %v1205 = vrcp.pop %v1183
  %v1206 = vrcp.pop %v1186
  %v1207 = vrcp.pop %v1189
  %v1208 = vrcp.pop %v1192
  %v1209 = vrcp.pop %v1195
  %v1210 = vrcp.pop %v1198
  %v1211 = vrcp.pop %v1201
  %v1212 = vrcp.pop %v1204
  %v1213 = vmul.f32 %v1166, %v1205
  %v1214 = vmul.f32 %v1168, %v1206
  %v1215 = vmul.f32 %v1170, %v1207
  %v1216 = vmul.f32 %v1172, %v1208
  %v1217 = vmul.f32 %v1174, %v1209
  %v1218 = vmul.f32 %v1176, %v1210
  %v1219 = vmul.f32 %v1178, %v1211
  %v1220 = vmul.f32 %v1180, %v1212
  %v1221 = vpack.c.bf16 %v1214, %v1213
  %v1222 = vpack.c.bf16 %v1216, %v1215
  %v1223 = vpack.c.bf16 %v1218, %v1217
  %v1224 = vpack.c.bf16 %v1220, %v1219
  %1225 = vrot.lane.b32.xlu0 %v357, 96
  %v1226 = vpop.permute.xlu0 %1225
  %1227 = vrot.lane.b32.xlu0 %v358, 96
  %v1228 = vpop.permute.xlu0 %1227
  %1229 = vrot.lane.b32.xlu0 %v359, 96
  %v1230 = vpop.permute.xlu0 %1229
  %1231 = vrot.lane.b32.xlu0 %v360, 96
  %v1232 = vpop.permute.xlu0 %1231
  %v1238 = vsel %vm248, %v1221, 0
  %v1241 = vsel %vm248, %v1222, 0
  %v1244 = vsel %vm248, %v1223, 0
  %v1247 = vsel %vm248, %v1224, 0
  %1249 = vmatpush.bf16.msra.mxu0 0
  %1250 = vmatpush.bf16.msra.mxu0 0
  %1251 = vmatpush.bf16.msra.mxu0 0
  %1252 = vmatpush.bf16.msra.mxu0 0
  %1253 = vmatpush.bf16.msra.mxu0 %v1232
  %1254 = vmatpush.bf16.msra.mxu0 %v1230
  %1255 = vmatpush.bf16.msra.mxu0 %v1228
  %1256 = vmatpush.bf16.msra.mxu0 %v1226
  %1257 = vmatmul.bf16.gmra.mxu0 %v1238
  %v1258 = vpop.f32.mrf.mxu0
  %v1259 = vadd.f32 0.0, %v1258
  %v1260 = vpop.f32.mrf.mxu0
  %v1261 = vadd.f32 0.0, %v1260
  %1262 = vmatmul.bf16.gmra.mxu0 %v1241
  %v1263 = vpop.f32.mrf.mxu0
  %v1264 = vadd.f32 0.0, %v1263
  %v1265 = vpop.f32.mrf.mxu0
  %v1266 = vadd.f32 0.0, %v1265
  %1267 = vmatmul.bf16.gmra.mxu0 %v1244
  %v1268 = vpop.f32.mrf.mxu0
  %v1269 = vadd.f32 0.0, %v1268
  %v1270 = vpop.f32.mrf.mxu0
  %v1271 = vadd.f32 0.0, %v1270
  %1272 = vmatmul.bf16.gmra.mxu0 %v1247
  %v1273 = vpop.f32.mrf.mxu0
  %v1274 = vadd.f32 0.0, %v1273
  %v1275 = vpop.f32.mrf.mxu0
  %v1276 = vadd.f32 0.0, %v1275
  %1277 = vdwg.mxu0
  %1278 = vset.pattern.permute.xlu0 69
  %1279 = vperm.xlu0 %1278, %v123
  %v1280 = vpop.permute.xlu0 %1279
  %1282 = vset.pattern.permute.xlu0 69
  %1283 = vperm.xlu0 %1282, %v125
  %v1284 = vpop.permute.xlu0 %1283
  %1286 = vset.pattern.permute.xlu0 69
  %1287 = vperm.xlu0 %1286, %v128
  %v1288 = vpop.permute.xlu0 %1287
  %1290 = vset.pattern.permute.xlu0 69
  %1291 = vperm.xlu0 %1290, %v130
  %v1292 = vpop.permute.xlu0 %1291
  %1294 = vset.pattern.permute.xlu0 69
  %1295 = vperm.xlu0 %1294, %v133
  %v1296 = vpop.permute.xlu0 %1295
  %1298 = vset.pattern.permute.xlu0 69
  %1299 = vperm.xlu0 %1298, %v135
  %v1300 = vpop.permute.xlu0 %1299
  %1302 = vset.pattern.permute.xlu0 69
  %1303 = vperm.xlu0 %1302, %v138
  %v1304 = vpop.permute.xlu0 %1303
  %1306 = vset.pattern.permute.xlu0 69
  %1307 = vperm.xlu0 %1306, %v140
  %v1308 = vpop.permute.xlu0 %1307
  %v1310 = vperm.slane %v156, 5
  %v1311 = vadd.f32 %v1280, %v1310
  %v1312 = vadd.f32 %v1284, %v1310
  %v1313 = vadd.f32 %v1288, %v1310
  %v1314 = vadd.f32 %v1292, %v1310
  %v1315 = vadd.f32 %v1296, %v1310
  %v1316 = vadd.f32 %v1300, %v1310
  %v1317 = vadd.f32 %v1304, %v1310
  %v1318 = vadd.f32 %v1308, %v1310
  %vm1319 = vcmp.gt.f32.partialorder %v1311, 0.0
  %vm1320 = vcmp.gt.f32.partialorder %v1312, 0.0
  %vm1321 = vcmp.gt.f32.partialorder %v1313, 0.0
  %vm1322 = vcmp.gt.f32.partialorder %v1314, 0.0
  %vm1323 = vcmp.gt.f32.partialorder %v1315, 0.0
  %vm1324 = vcmp.gt.f32.partialorder %v1316, 0.0
  %vm1325 = vcmp.gt.f32.partialorder %v1317, 0.0
  %vm1326 = vcmp.gt.f32.partialorder %v1318, 0.0
  %v1327 = vmul.f32 %v1311, 0.2
  %v1328 = vmul.f32 %v1312, 0.2
  %v1329 = vmul.f32 %v1313, 0.2
  %v1330 = vmul.f32 %v1314, 0.2
  %v1331 = vmul.f32 %v1315, 0.2
  %v1332 = vmul.f32 %v1316, 0.2
  %v1333 = vmul.f32 %v1317, 0.2
  %v1334 = vmul.f32 %v1318, 0.2
  %v1335 = vsel %vm1319, %v1311, %v1327
  %v1336 = vsel %vm1320, %v1312, %v1328
  %v1337 = vsel %vm1321, %v1313, %v1329
  %v1338 = vsel %vm1322, %v1314, %v1330
  %v1339 = vsel %vm1323, %v1315, %v1331
  %v1340 = vsel %vm1324, %v1316, %v1332
  %v1341 = vsel %vm1325, %v1317, %v1333
  %v1342 = vsel %vm1326, %v1318, %v1334
  %v1343 = vadd.f32 %v1335, %v56
  %v1344 = vadd.f32 %v1336, %v57
  %v1345 = vadd.f32 %v1337, %v58
  %v1346 = vadd.f32 %v1338, %v59
  %v1347 = vadd.f32 %v1339, %v60
  %v1348 = vadd.f32 %v1340, %v61
  %v1349 = vadd.f32 %v1341, %v62
  %v1350 = vadd.f32 %v1342, %v63
  %v1351 = vsel %vm248, %v1343, -inf
  %1352 = vmax.xlane.f32.xlu0 %v1351
  %v1353 = vpop.xlane.xlu0 %1352
  %v1354 = vsel %vm248, %v1344, -inf
  %1355 = vmax.xlane.f32.xlu0 %v1354
  %v1356 = vpop.xlane.xlu0 %1355
  %v1357 = vsel %vm248, %v1345, -inf
  %1358 = vmax.xlane.f32.xlu0 %v1357
  %v1359 = vpop.xlane.xlu0 %1358
  %v1360 = vsel %vm248, %v1346, -inf
  %1361 = vmax.xlane.f32.xlu0 %v1360
  %v1362 = vpop.xlane.xlu0 %1361
  %v1363 = vsel %vm248, %v1347, -inf
  %1364 = vmax.xlane.f32.xlu0 %v1363
  %v1365 = vpop.xlane.xlu0 %1364
  %v1366 = vsel %vm248, %v1348, -inf
  %1367 = vmax.xlane.f32.xlu0 %v1366
  %v1368 = vpop.xlane.xlu0 %1367
  %v1369 = vsel %vm248, %v1349, -inf
  %1370 = vmax.xlane.f32.xlu0 %v1369
  %v1371 = vpop.xlane.xlu0 %1370
  %v1372 = vsel %vm248, %v1350, -inf
  %1373 = vmax.xlane.f32.xlu0 %v1372
  %v1374 = vpop.xlane.xlu0 %1373
  %v1375 = vsub.f32 %v1343, %v1353
  %v1376 = vsub.f32 %v1344, %v1356
  %v1377 = vsub.f32 %v1345, %v1359
  %v1378 = vsub.f32 %v1346, %v1362
  %v1379 = vsub.f32 %v1347, %v1365
  %v1380 = vsub.f32 %v1348, %v1368
  %v1381 = vsub.f32 %v1349, %v1371
  %v1382 = vsub.f32 %v1350, %v1374
  %v1383 = vmul.f32 %v1375, 1.442695
  %v1384 = vpow.pop %v1383
  %v1385 = vmul.f32 %v1376, 1.442695
  %v1386 = vpow.pop %v1385
  %v1387 = vmul.f32 %v1377, 1.442695
  %v1388 = vpow.pop %v1387
  %v1389 = vmul.f32 %v1378, 1.442695
  %v1390 = vpow.pop %v1389
  %v1391 = vmul.f32 %v1379, 1.442695
  %v1392 = vpow.pop %v1391
  %v1393 = vmul.f32 %v1380, 1.442695
  %v1394 = vpow.pop %v1393
  %v1395 = vmul.f32 %v1381, 1.442695
  %v1396 = vpow.pop %v1395
  %v1397 = vmul.f32 %v1382, 1.442695
  %v1398 = vpow.pop %v1397
  %v1399 = vsel %vm248, %v1384, 0.0
  %1400 = vadd.xlane.f32.xlu0 %v1399
  %v1401 = vpop.xlane.xlu0 %1400
  %v1402 = vsel %vm248, %v1386, 0.0
  %1403 = vadd.xlane.f32.xlu0 %v1402
  %v1404 = vpop.xlane.xlu0 %1403
  %v1405 = vsel %vm248, %v1388, 0.0
  %1406 = vadd.xlane.f32.xlu0 %v1405
  %v1407 = vpop.xlane.xlu0 %1406
  %v1408 = vsel %vm248, %v1390, 0.0
  %1409 = vadd.xlane.f32.xlu0 %v1408
  %v1410 = vpop.xlane.xlu0 %1409
  %v1411 = vsel %vm248, %v1392, 0.0
  %1412 = vadd.xlane.f32.xlu0 %v1411
  %v1413 = vpop.xlane.xlu0 %1412
  %v1414 = vsel %vm248, %v1394, 0.0
  %1415 = vadd.xlane.f32.xlu0 %v1414
  %v1416 = vpop.xlane.xlu0 %1415
  %v1417 = vsel %vm248, %v1396, 0.0
  %1418 = vadd.xlane.f32.xlu0 %v1417
  %v1419 = vpop.xlane.xlu0 %1418
  %v1420 = vsel %vm248, %v1398, 0.0
  %1421 = vadd.xlane.f32.xlu0 %v1420
  %v1422 = vpop.xlane.xlu0 %1421
  %v1423 = vrcp.pop %v1401
  %v1424 = vrcp.pop %v1404
  %v1425 = vrcp.pop %v1407
  %v1426 = vrcp.pop %v1410
  %v1427 = vrcp.pop %v1413
  %v1428 = vrcp.pop %v1416
  %v1429 = vrcp.pop %v1419
  %v1430 = vrcp.pop %v1422
  %v1431 = vmul.f32 %v1384, %v1423
  %v1432 = vmul.f32 %v1386, %v1424
  %v1433 = vmul.f32 %v1388, %v1425
  %v1434 = vmul.f32 %v1390, %v1426
  %v1435 = vmul.f32 %v1392, %v1427
  %v1436 = vmul.f32 %v1394, %v1428
  %v1437 = vmul.f32 %v1396, %v1429
  %v1438 = vmul.f32 %v1398, %v1430
  %v1439 = vpack.c.bf16 %v1432, %v1431
  %v1440 = vpack.c.bf16 %v1434, %v1433
  %v1441 = vpack.c.bf16 %v1436, %v1435
  %v1442 = vpack.c.bf16 %v1438, %v1437
  %1443 = vrot.lane.b32.xlu0 %v357, 88
  %v1444 = vpop.permute.xlu0 %1443
  %1445 = vrot.lane.b32.xlu0 %v358, 88
  %v1446 = vpop.permute.xlu0 %1445
  %1447 = vrot.lane.b32.xlu0 %v359, 88
  %v1448 = vpop.permute.xlu0 %1447
  %1449 = vrot.lane.b32.xlu0 %v360, 88
  %v1450 = vpop.permute.xlu0 %1449
  %v1456 = vsel %vm248, %v1439, 0
  %v1459 = vsel %vm248, %v1440, 0
  %v1462 = vsel %vm248, %v1441, 0
  %v1465 = vsel %vm248, %v1442, 0
  %1467 = vmatpush.bf16.msra.mxu0 0
  %1468 = vmatpush.bf16.msra.mxu0 0
  %1469 = vmatpush.bf16.msra.mxu0 0
  %1470 = vmatpush.bf16.msra.mxu0 0
  %1471 = vmatpush.bf16.msra.mxu0 %v1450
  %1472 = vmatpush.bf16.msra.mxu0 %v1448
  %1473 = vmatpush.bf16.msra.mxu0 %v1446
  %1474 = vmatpush.bf16.msra.mxu0 %v1444
  %1475 = vmatmul.bf16.gmra.mxu0 %v1456
  %v1476 = vpop.f32.mrf.mxu0
  %v1477 = vadd.f32 0.0, %v1476
  %v1478 = vpop.f32.mrf.mxu0
  %v1479 = vadd.f32 0.0, %v1478
  %1480 = vmatmul.bf16.gmra.mxu0 %v1459
  %v1481 = vpop.f32.mrf.mxu0
  %v1482 = vadd.f32 0.0, %v1481
  %v1483 = vpop.f32.mrf.mxu0
  %v1484 = vadd.f32 0.0, %v1483
  %1485 = vmatmul.bf16.gmra.mxu0 %v1462
  %v1486 = vpop.f32.mrf.mxu0
  %v1487 = vadd.f32 0.0, %v1486
  %v1488 = vpop.f32.mrf.mxu0
  %v1489 = vadd.f32 0.0, %v1488
  %1490 = vmatmul.bf16.gmra.mxu0 %v1465
  %v1491 = vpop.f32.mrf.mxu0
  %v1492 = vadd.f32 0.0, %v1491
  %v1493 = vpop.f32.mrf.mxu0
  %v1494 = vadd.f32 0.0, %v1493
  %1495 = vdwg.mxu0
  %1496 = vset.pattern.permute.xlu0 70
  %1497 = vperm.xlu0 %1496, %v123
  %v1498 = vpop.permute.xlu0 %1497
  %1500 = vset.pattern.permute.xlu0 70
  %1501 = vperm.xlu0 %1500, %v125
  %v1502 = vpop.permute.xlu0 %1501
  %1504 = vset.pattern.permute.xlu0 70
  %1505 = vperm.xlu0 %1504, %v128
  %v1506 = vpop.permute.xlu0 %1505
  %1508 = vset.pattern.permute.xlu0 70
  %1509 = vperm.xlu0 %1508, %v130
  %v1510 = vpop.permute.xlu0 %1509
  %1512 = vset.pattern.permute.xlu0 70
  %1513 = vperm.xlu0 %1512, %v133
  %v1514 = vpop.permute.xlu0 %1513
  %1516 = vset.pattern.permute.xlu0 70
  %1517 = vperm.xlu0 %1516, %v135
  %v1518 = vpop.permute.xlu0 %1517
  %1520 = vset.pattern.permute.xlu0 70
  %1521 = vperm.xlu0 %1520, %v138
  %v1522 = vpop.permute.xlu0 %1521
  %1524 = vset.pattern.permute.xlu0 70
  %1525 = vperm.xlu0 %1524, %v140
  %v1526 = vpop.permute.xlu0 %1525
  %v1528 = vperm.slane %v156, 6
  %v1529 = vadd.f32 %v1498, %v1528
  %v1530 = vadd.f32 %v1502, %v1528
  %v1531 = vadd.f32 %v1506, %v1528
  %v1532 = vadd.f32 %v1510, %v1528
  %v1533 = vadd.f32 %v1514, %v1528
  %v1534 = vadd.f32 %v1518, %v1528
  %v1535 = vadd.f32 %v1522, %v1528
  %v1536 = vadd.f32 %v1526, %v1528
  %vm1537 = vcmp.gt.f32.partialorder %v1529, 0.0
  %vm1538 = vcmp.gt.f32.partialorder %v1530, 0.0
  %vm1539 = vcmp.gt.f32.partialorder %v1531, 0.0
  %vm1540 = vcmp.gt.f32.partialorder %v1532, 0.0
  %vm1541 = vcmp.gt.f32.partialorder %v1533, 0.0
  %vm1542 = vcmp.gt.f32.partialorder %v1534, 0.0
  %vm1543 = vcmp.gt.f32.partialorder %v1535, 0.0
  %vm1544 = vcmp.gt.f32.partialorder %v1536, 0.0
  %v1545 = vmul.f32 %v1529, 0.2
  %v1546 = vmul.f32 %v1530, 0.2
  %v1547 = vmul.f32 %v1531, 0.2
  %v1548 = vmul.f32 %v1532, 0.2
  %v1549 = vmul.f32 %v1533, 0.2
  %v1550 = vmul.f32 %v1534, 0.2
  %v1551 = vmul.f32 %v1535, 0.2
  %v1552 = vmul.f32 %v1536, 0.2
  %v1553 = vsel %vm1537, %v1529, %v1545
  %v1554 = vsel %vm1538, %v1530, %v1546
  %v1555 = vsel %vm1539, %v1531, %v1547
  %v1556 = vsel %vm1540, %v1532, %v1548
  %v1557 = vsel %vm1541, %v1533, %v1549
  %v1558 = vsel %vm1542, %v1534, %v1550
  %v1559 = vsel %vm1543, %v1535, %v1551
  %v1560 = vsel %vm1544, %v1536, %v1552
  %v1561 = vadd.f32 %v1553, %v56
  %v1562 = vadd.f32 %v1554, %v57
  %v1563 = vadd.f32 %v1555, %v58
  %v1564 = vadd.f32 %v1556, %v59
  %v1565 = vadd.f32 %v1557, %v60
  %v1566 = vadd.f32 %v1558, %v61
  %v1567 = vadd.f32 %v1559, %v62
  %v1568 = vadd.f32 %v1560, %v63
  %v1569 = vsel %vm248, %v1561, -inf
  %1570 = vmax.xlane.f32.xlu0 %v1569
  %v1571 = vpop.xlane.xlu0 %1570
  %v1572 = vsel %vm248, %v1562, -inf
  %1573 = vmax.xlane.f32.xlu0 %v1572
  %v1574 = vpop.xlane.xlu0 %1573
  %v1575 = vsel %vm248, %v1563, -inf
  %1576 = vmax.xlane.f32.xlu0 %v1575
  %v1577 = vpop.xlane.xlu0 %1576
  %v1578 = vsel %vm248, %v1564, -inf
  %1579 = vmax.xlane.f32.xlu0 %v1578
  %v1580 = vpop.xlane.xlu0 %1579
  %v1581 = vsel %vm248, %v1565, -inf
  %1582 = vmax.xlane.f32.xlu0 %v1581
  %v1583 = vpop.xlane.xlu0 %1582
  %v1584 = vsel %vm248, %v1566, -inf
  %1585 = vmax.xlane.f32.xlu0 %v1584
  %v1586 = vpop.xlane.xlu0 %1585
  %v1587 = vsel %vm248, %v1567, -inf
  %1588 = vmax.xlane.f32.xlu0 %v1587
  %v1589 = vpop.xlane.xlu0 %1588
  %v1590 = vsel %vm248, %v1568, -inf
  %1591 = vmax.xlane.f32.xlu0 %v1590
  %v1592 = vpop.xlane.xlu0 %1591
  %v1593 = vsub.f32 %v1561, %v1571
  %v1594 = vsub.f32 %v1562, %v1574
  %v1595 = vsub.f32 %v1563, %v1577
  %v1596 = vsub.f32 %v1564, %v1580
  %v1597 = vsub.f32 %v1565, %v1583
  %v1598 = vsub.f32 %v1566, %v1586
  %v1599 = vsub.f32 %v1567, %v1589
  %v1600 = vsub.f32 %v1568, %v1592
  %v1601 = vmul.f32 %v1593, 1.442695
  %v1602 = vpow.pop %v1601
  %v1603 = vmul.f32 %v1594, 1.442695
  %v1604 = vpow.pop %v1603
  %v1605 = vmul.f32 %v1595, 1.442695
  %v1606 = vpow.pop %v1605
  %v1607 = vmul.f32 %v1596, 1.442695
  %v1608 = vpow.pop %v1607
  %v1609 = vmul.f32 %v1597, 1.442695
  %v1610 = vpow.pop %v1609
  %v1611 = vmul.f32 %v1598, 1.442695
  %v1612 = vpow.pop %v1611
  %v1613 = vmul.f32 %v1599, 1.442695
  %v1614 = vpow.pop %v1613
  %v1615 = vmul.f32 %v1600, 1.442695
  %v1616 = vpow.pop %v1615
  %v1617 = vsel %vm248, %v1602, 0.0
  %1618 = vadd.xlane.f32.xlu0 %v1617
  %v1619 = vpop.xlane.xlu0 %1618
  %v1620 = vsel %vm248, %v1604, 0.0
  %1621 = vadd.xlane.f32.xlu0 %v1620
  %v1622 = vpop.xlane.xlu0 %1621
  %v1623 = vsel %vm248, %v1606, 0.0
  %1624 = vadd.xlane.f32.xlu0 %v1623
  %v1625 = vpop.xlane.xlu0 %1624
  %v1626 = vsel %vm248, %v1608, 0.0
  %1627 = vadd.xlane.f32.xlu0 %v1626
  %v1628 = vpop.xlane.xlu0 %1627
  %v1629 = vsel %vm248, %v1610, 0.0
  %1630 = vadd.xlane.f32.xlu0 %v1629
  %v1631 = vpop.xlane.xlu0 %1630
  %v1632 = vsel %vm248, %v1612, 0.0
  %1633 = vadd.xlane.f32.xlu0 %v1632
  %v1634 = vpop.xlane.xlu0 %1633
  %v1635 = vsel %vm248, %v1614, 0.0
  %1636 = vadd.xlane.f32.xlu0 %v1635
  %v1637 = vpop.xlane.xlu0 %1636
  %v1638 = vsel %vm248, %v1616, 0.0
  %1639 = vadd.xlane.f32.xlu0 %v1638
  %v1640 = vpop.xlane.xlu0 %1639
  %v1641 = vrcp.pop %v1619
  %v1642 = vrcp.pop %v1622
  %v1643 = vrcp.pop %v1625
  %v1644 = vrcp.pop %v1628
  %v1645 = vrcp.pop %v1631
  %v1646 = vrcp.pop %v1634
  %v1647 = vrcp.pop %v1637
  %v1648 = vrcp.pop %v1640
  %v1649 = vmul.f32 %v1602, %v1641
  %v1650 = vmul.f32 %v1604, %v1642
  %v1651 = vmul.f32 %v1606, %v1643
  %v1652 = vmul.f32 %v1608, %v1644
  %v1653 = vmul.f32 %v1610, %v1645
  %v1654 = vmul.f32 %v1612, %v1646
  %v1655 = vmul.f32 %v1614, %v1647
  %v1656 = vmul.f32 %v1616, %v1648
  %v1657 = vpack.c.bf16 %v1650, %v1649
  %v1658 = vpack.c.bf16 %v1652, %v1651
  %v1659 = vpack.c.bf16 %v1654, %v1653
  %v1660 = vpack.c.bf16 %v1656, %v1655
  %1661 = vrot.lane.b32.xlu0 %v357, 80
  %v1662 = vpop.permute.xlu0 %1661
  %1663 = vrot.lane.b32.xlu0 %v358, 80
  %v1664 = vpop.permute.xlu0 %1663
  %1665 = vrot.lane.b32.xlu0 %v359, 80
  %v1666 = vpop.permute.xlu0 %1665
  %1667 = vrot.lane.b32.xlu0 %v360, 80
  %v1668 = vpop.permute.xlu0 %1667
  %v1674 = vsel %vm248, %v1657, 0
  %v1677 = vsel %vm248, %v1658, 0
  %v1680 = vsel %vm248, %v1659, 0
  %v1683 = vsel %vm248, %v1660, 0
  %1685 = vmatpush.bf16.msra.mxu0 0
  %1686 = vmatpush.bf16.msra.mxu0 0
  %1687 = vmatpush.bf16.msra.mxu0 0
  %1688 = vmatpush.bf16.msra.mxu0 0
  %1689 = vmatpush.bf16.msra.mxu0 %v1668
  %1690 = vmatpush.bf16.msra.mxu0 %v1666
  %1691 = vmatpush.bf16.msra.mxu0 %v1664
  %1692 = vmatpush.bf16.msra.mxu0 %v1662
  %1693 = vmatmul.bf16.gmra.mxu0 %v1674
  %v1694 = vpop.f32.mrf.mxu0
  %v1695 = vadd.f32 0.0, %v1694
  %v1696 = vpop.f32.mrf.mxu0
  %v1697 = vadd.f32 0.0, %v1696
  %1698 = vmatmul.bf16.gmra.mxu0 %v1677
  %v1699 = vpop.f32.mrf.mxu0
  %v1700 = vadd.f32 0.0, %v1699
  %v1701 = vpop.f32.mrf.mxu0
  %v1702 = vadd.f32 0.0, %v1701
  %1703 = vmatmul.bf16.gmra.mxu0 %v1680
  %v1704 = vpop.f32.mrf.mxu0
  %v1705 = vadd.f32 0.0, %v1704
  %v1706 = vpop.f32.mrf.mxu0
  %v1707 = vadd.f32 0.0, %v1706
  %1708 = vmatmul.bf16.gmra.mxu0 %v1683
  %v1709 = vpop.f32.mrf.mxu0
  %v1710 = vadd.f32 0.0, %v1709
  %v1711 = vpop.f32.mrf.mxu0
  %v1712 = vadd.f32 0.0, %v1711
  %1713 = vdwg.mxu0
  %1714 = vset.pattern.permute.xlu0 71
  %1715 = vperm.xlu0 %1714, %v123
  %v1716 = vpop.permute.xlu0 %1715
  %1718 = vset.pattern.permute.xlu0 71
  %1719 = vperm.xlu0 %1718, %v125
  %v1720 = vpop.permute.xlu0 %1719
  %1722 = vset.pattern.permute.xlu0 71
  %1723 = vperm.xlu0 %1722, %v128
  %v1724 = vpop.permute.xlu0 %1723
  %1726 = vset.pattern.permute.xlu0 71
  %1727 = vperm.xlu0 %1726, %v130
  %v1728 = vpop.permute.xlu0 %1727
  %1730 = vset.pattern.permute.xlu0 71
  %1731 = vperm.xlu0 %1730, %v133
  %v1732 = vpop.permute.xlu0 %1731
  %1734 = vset.pattern.permute.xlu0 71
  %1735 = vperm.xlu0 %1734, %v135
  %v1736 = vpop.permute.xlu0 %1735
  %1738 = vset.pattern.permute.xlu0 71
  %1739 = vperm.xlu0 %1738, %v138
  %v1740 = vpop.permute.xlu0 %1739
  %1742 = vset.pattern.permute.xlu0 71
  %1743 = vperm.xlu0 %1742, %v140
  %v1744 = vpop.permute.xlu0 %1743
  %v1746 = vperm.slane %v156, 7
  %v1747 = vadd.f32 %v1716, %v1746
  %v1748 = vadd.f32 %v1720, %v1746
  %v1749 = vadd.f32 %v1724, %v1746
  %v1750 = vadd.f32 %v1728, %v1746
  %v1751 = vadd.f32 %v1732, %v1746
  %v1752 = vadd.f32 %v1736, %v1746
  %v1753 = vadd.f32 %v1740, %v1746
  %v1754 = vadd.f32 %v1744, %v1746
  %vm1755 = vcmp.gt.f32.partialorder %v1747, 0.0
  %vm1756 = vcmp.gt.f32.partialorder %v1748, 0.0
  %vm1757 = vcmp.gt.f32.partialorder %v1749, 0.0
  %vm1758 = vcmp.gt.f32.partialorder %v1750, 0.0
  %vm1759 = vcmp.gt.f32.partialorder %v1751, 0.0
  %vm1760 = vcmp.gt.f32.partialorder %v1752, 0.0
  %vm1761 = vcmp.gt.f32.partialorder %v1753, 0.0
  %vm1762 = vcmp.gt.f32.partialorder %v1754, 0.0
  %v1763 = vmul.f32 %v1747, 0.2
  %v1764 = vmul.f32 %v1748, 0.2
  %v1765 = vmul.f32 %v1749, 0.2
  %v1766 = vmul.f32 %v1750, 0.2
  %v1767 = vmul.f32 %v1751, 0.2
  %v1768 = vmul.f32 %v1752, 0.2
  %v1769 = vmul.f32 %v1753, 0.2
  %v1770 = vmul.f32 %v1754, 0.2
  %v1771 = vsel %vm1755, %v1747, %v1763
  %v1772 = vsel %vm1756, %v1748, %v1764
  %v1773 = vsel %vm1757, %v1749, %v1765
  %v1774 = vsel %vm1758, %v1750, %v1766
  %v1775 = vsel %vm1759, %v1751, %v1767
  %v1776 = vsel %vm1760, %v1752, %v1768
  %v1777 = vsel %vm1761, %v1753, %v1769
  %v1778 = vsel %vm1762, %v1754, %v1770
  %v1779 = vadd.f32 %v1771, %v56
  %v1780 = vadd.f32 %v1772, %v57
  %v1781 = vadd.f32 %v1773, %v58
  %v1782 = vadd.f32 %v1774, %v59
  %v1783 = vadd.f32 %v1775, %v60
  %v1784 = vadd.f32 %v1776, %v61
  %v1785 = vadd.f32 %v1777, %v62
  %v1786 = vadd.f32 %v1778, %v63
  %v1787 = vsel %vm248, %v1779, -inf
  %1788 = vmax.xlane.f32.xlu0 %v1787
  %v1789 = vpop.xlane.xlu0 %1788
  %v1790 = vsel %vm248, %v1780, -inf
  %1791 = vmax.xlane.f32.xlu0 %v1790
  %v1792 = vpop.xlane.xlu0 %1791
  %v1793 = vsel %vm248, %v1781, -inf
  %1794 = vmax.xlane.f32.xlu0 %v1793
  %v1795 = vpop.xlane.xlu0 %1794
  %v1796 = vsel %vm248, %v1782, -inf
  %1797 = vmax.xlane.f32.xlu0 %v1796
  %v1798 = vpop.xlane.xlu0 %1797
  %v1799 = vsel %vm248, %v1783, -inf
  %1800 = vmax.xlane.f32.xlu0 %v1799
  %v1801 = vpop.xlane.xlu0 %1800
  %v1802 = vsel %vm248, %v1784, -inf
  %1803 = vmax.xlane.f32.xlu0 %v1802
  %v1804 = vpop.xlane.xlu0 %1803
  %v1805 = vsel %vm248, %v1785, -inf
  %1806 = vmax.xlane.f32.xlu0 %v1805
  %v1807 = vpop.xlane.xlu0 %1806
  %v1808 = vsel %vm248, %v1786, -inf
  %1809 = vmax.xlane.f32.xlu0 %v1808
  %v1810 = vpop.xlane.xlu0 %1809
  %v1811 = vsub.f32 %v1779, %v1789
  %v1812 = vsub.f32 %v1780, %v1792
  %v1813 = vsub.f32 %v1781, %v1795
  %v1814 = vsub.f32 %v1782, %v1798
  %v1815 = vsub.f32 %v1783, %v1801
  %v1816 = vsub.f32 %v1784, %v1804
  %v1817 = vsub.f32 %v1785, %v1807
  %v1818 = vsub.f32 %v1786, %v1810
  %v1819 = vmul.f32 %v1811, 1.442695
  %v1820 = vpow.pop %v1819
  %v1821 = vmul.f32 %v1812, 1.442695
  %v1822 = vpow.pop %v1821
  %v1823 = vmul.f32 %v1813, 1.442695
  %v1824 = vpow.pop %v1823
  %v1825 = vmul.f32 %v1814, 1.442695
  %v1826 = vpow.pop %v1825
  %v1827 = vmul.f32 %v1815, 1.442695
  %v1828 = vpow.pop %v1827
  %v1829 = vmul.f32 %v1816, 1.442695
  %v1830 = vpow.pop %v1829
  %v1831 = vmul.f32 %v1817, 1.442695
  %v1832 = vpow.pop %v1831
  %v1833 = vmul.f32 %v1818, 1.442695
  %v1834 = vpow.pop %v1833
  %v1835 = vsel %vm248, %v1820, 0.0
  %1836 = vadd.xlane.f32.xlu0 %v1835
  %v1837 = vpop.xlane.xlu0 %1836
  %v1838 = vsel %vm248, %v1822, 0.0
  %1839 = vadd.xlane.f32.xlu0 %v1838
  %v1840 = vpop.xlane.xlu0 %1839
  %v1841 = vsel %vm248, %v1824, 0.0
  %1842 = vadd.xlane.f32.xlu0 %v1841
  %v1843 = vpop.xlane.xlu0 %1842
  %v1844 = vsel %vm248, %v1826, 0.0
  %1845 = vadd.xlane.f32.xlu0 %v1844
  %v1846 = vpop.xlane.xlu0 %1845
  %v1847 = vsel %vm248, %v1828, 0.0
  %1848 = vadd.xlane.f32.xlu0 %v1847
  %v1849 = vpop.xlane.xlu0 %1848
  %v1850 = vsel %vm248, %v1830, 0.0
  %1851 = vadd.xlane.f32.xlu0 %v1850
  %v1852 = vpop.xlane.xlu0 %1851
  %v1853 = vsel %vm248, %v1832, 0.0
  %1854 = vadd.xlane.f32.xlu0 %v1853
  %v1855 = vpop.xlane.xlu0 %1854
  %v1856 = vsel %vm248, %v1834, 0.0
  %1857 = vadd.xlane.f32.xlu0 %v1856
  %v1858 = vpop.xlane.xlu0 %1857
  %v1859 = vrcp.pop %v1837
  %v1860 = vrcp.pop %v1840
  %v1861 = vrcp.pop %v1843
  %v1862 = vrcp.pop %v1846
  %v1863 = vrcp.pop %v1849
  %v1864 = vrcp.pop %v1852
  %v1865 = vrcp.pop %v1855
  %v1866 = vrcp.pop %v1858
  %v1867 = vmul.f32 %v1820, %v1859
  %v1868 = vmul.f32 %v1822, %v1860
  %v1869 = vmul.f32 %v1824, %v1861
  %v1870 = vmul.f32 %v1826, %v1862
  %v1871 = vmul.f32 %v1828, %v1863
  %v1872 = vmul.f32 %v1830, %v1864
  %v1873 = vmul.f32 %v1832, %v1865
  %v1874 = vmul.f32 %v1834, %v1866
  %v1875 = vpack.c.bf16 %v1868, %v1867
  %v1876 = vpack.c.bf16 %v1870, %v1869
  %v1877 = vpack.c.bf16 %v1872, %v1871
  %v1878 = vpack.c.bf16 %v1874, %v1873
  %1879 = vrot.lane.b32.xlu0 %v357, 72
  %v1880 = vpop.permute.xlu0 %1879
  %1881 = vrot.lane.b32.xlu0 %v358, 72
  %v1882 = vpop.permute.xlu0 %1881
  %1883 = vrot.lane.b32.xlu0 %v359, 72
  %v1884 = vpop.permute.xlu0 %1883
  %1885 = vrot.lane.b32.xlu0 %v360, 72
  %v1886 = vpop.permute.xlu0 %1885
  %v1892 = vsel %vm248, %v1875, 0
  %v1895 = vsel %vm248, %v1876, 0
  %v1898 = vsel %vm248, %v1877, 0
  %v1901 = vsel %vm248, %v1878, 0
  %1903 = vmatpush.bf16.msra.mxu0 0
  %1904 = vmatpush.bf16.msra.mxu0 0
  %1905 = vmatpush.bf16.msra.mxu0 0
  %1906 = vmatpush.bf16.msra.mxu0 0
  %1907 = vmatpush.bf16.msra.mxu0 %v1886
  %1908 = vmatpush.bf16.msra.mxu0 %v1884
  %1909 = vmatpush.bf16.msra.mxu0 %v1882
  %1910 = vmatpush.bf16.msra.mxu0 %v1880
  %1911 = vmatmul.bf16.gmra.mxu0 %v1892
  %v1912 = vpop.f32.mrf.mxu0
  %v1913 = vadd.f32 0.0, %v1912
  %v1914 = vpop.f32.mrf.mxu0
  %v1915 = vadd.f32 0.0, %v1914
  %1916 = vmatmul.bf16.gmra.mxu0 %v1895
  %v1917 = vpop.f32.mrf.mxu0
  %v1918 = vadd.f32 0.0, %v1917
  %v1919 = vpop.f32.mrf.mxu0
  %v1920 = vadd.f32 0.0, %v1919
  %1921 = vmatmul.bf16.gmra.mxu0 %v1898
  %v1922 = vpop.f32.mrf.mxu0
  %v1923 = vadd.f32 0.0, %v1922
  %v1924 = vpop.f32.mrf.mxu0
  %v1925 = vadd.f32 0.0, %v1924
  %1926 = vmatmul.bf16.gmra.mxu0 %v1901
  %v1927 = vpop.f32.mrf.mxu0
  %v1928 = vadd.f32 0.0, %v1927
  %v1929 = vpop.f32.mrf.mxu0
  %v1930 = vadd.f32 0.0, %v1929
  %1931 = vdwg.mxu0
  %1940 = vrot.lane.b32.xlu0 %v605, 8
  %v1941 = vpop.permute.xlu0 %1940
  %1942 = vrot.lane.b32.xlu0 %v607, 8
  %v1943 = vpop.permute.xlu0 %1942
  %1944 = vrot.lane.b32.xlu0 %v610, 8
  %v1945 = vpop.permute.xlu0 %1944
  %1946 = vrot.lane.b32.xlu0 %v612, 8
  %v1947 = vpop.permute.xlu0 %1946
  %1948 = vrot.lane.b32.xlu0 %v615, 8
  %v1949 = vpop.permute.xlu0 %1948
  %1950 = vrot.lane.b32.xlu0 %v617, 8
  %v1951 = vpop.permute.xlu0 %1950
  %1952 = vrot.lane.b32.xlu0 %v620, 8
  %v1953 = vpop.permute.xlu0 %1952
  %1954 = vrot.lane.b32.xlu0 %v622, 8
  %v1955 = vpop.permute.xlu0 %1954
  %1972 = vrot.lane.b32.xlu0 %v823, 16
  %v1973 = vpop.permute.xlu0 %1972
  %1974 = vrot.lane.b32.xlu0 %v825, 16
  %v1975 = vpop.permute.xlu0 %1974
  %1976 = vrot.lane.b32.xlu0 %v828, 16
  %v1977 = vpop.permute.xlu0 %1976
  %1978 = vrot.lane.b32.xlu0 %v830, 16
  %v1979 = vpop.permute.xlu0 %1978
  %1980 = vrot.lane.b32.xlu0 %v833, 16
  %v1981 = vpop.permute.xlu0 %1980
  %1982 = vrot.lane.b32.xlu0 %v835, 16
  %v1983 = vpop.permute.xlu0 %1982
  %1984 = vrot.lane.b32.xlu0 %v838, 16
  %v1985 = vpop.permute.xlu0 %1984
  %1986 = vrot.lane.b32.xlu0 %v840, 16
  %v1987 = vpop.permute.xlu0 %1986
  %2004 = vrot.lane.b32.xlu0 %v1041, 24
  %v2005 = vpop.permute.xlu0 %2004
  %2006 = vrot.lane.b32.xlu0 %v1043, 24
  %v2007 = vpop.permute.xlu0 %2006
  %2008 = vrot.lane.b32.xlu0 %v1046, 24
  %v2009 = vpop.permute.xlu0 %2008
  %2010 = vrot.lane.b32.xlu0 %v1048, 24
  %v2011 = vpop.permute.xlu0 %2010
  %2012 = vrot.lane.b32.xlu0 %v1051, 24
  %v2013 = vpop.permute.xlu0 %2012
  %2014 = vrot.lane.b32.xlu0 %v1053, 24
  %v2015 = vpop.permute.xlu0 %2014
  %2016 = vrot.lane.b32.xlu0 %v1056, 24
  %v2017 = vpop.permute.xlu0 %2016
  %2018 = vrot.lane.b32.xlu0 %v1058, 24
  %v2019 = vpop.permute.xlu0 %2018
  %2036 = vrot.lane.b32.xlu0 %v1259, 32
  %v2037 = vpop.permute.xlu0 %2036
  %2038 = vrot.lane.b32.xlu0 %v1261, 32
  %v2039 = vpop.permute.xlu0 %2038
  %2040 = vrot.lane.b32.xlu0 %v1264, 32
  %v2041 = vpop.permute.xlu0 %2040
  %2042 = vrot.lane.b32.xlu0 %v1266, 32
  %v2043 = vpop.permute.xlu0 %2042
  %2044 = vrot.lane.b32.xlu0 %v1269, 32
  %v2045 = vpop.permute.xlu0 %2044
  %2046 = vrot.lane.b32.xlu0 %v1271, 32
  %v2047 = vpop.permute.xlu0 %2046
  %2048 = vrot.lane.b32.xlu0 %v1274, 32
  %v2049 = vpop.permute.xlu0 %2048
  %2050 = vrot.lane.b32.xlu0 %v1276, 32
  %v2051 = vpop.permute.xlu0 %2050
  %2068 = vrot.lane.b32.xlu0 %v1477, 40
  %v2069 = vpop.permute.xlu0 %2068
  %2070 = vrot.lane.b32.xlu0 %v1479, 40
  %v2071 = vpop.permute.xlu0 %2070
  %2072 = vrot.lane.b32.xlu0 %v1482, 40
  %v2073 = vpop.permute.xlu0 %2072
  %2074 = vrot.lane.b32.xlu0 %v1484, 40
  %v2075 = vpop.permute.xlu0 %2074
  %2076 = vrot.lane.b32.xlu0 %v1487, 40
  %v2077 = vpop.permute.xlu0 %2076
  %2078 = vrot.lane.b32.xlu0 %v1489, 40
  %v2079 = vpop.permute.xlu0 %2078
  %2080 = vrot.lane.b32.xlu0 %v1492, 40
  %v2081 = vpop.permute.xlu0 %2080
  %2082 = vrot.lane.b32.xlu0 %v1494, 40
  %v2083 = vpop.permute.xlu0 %2082
  %2100 = vrot.lane.b32.xlu0 %v1695, 48
  %v2101 = vpop.permute.xlu0 %2100
  %2102 = vrot.lane.b32.xlu0 %v1697, 48
  %v2103 = vpop.permute.xlu0 %2102
  %2104 = vrot.lane.b32.xlu0 %v1700, 48
  %v2105 = vpop.permute.xlu0 %2104
  %2106 = vrot.lane.b32.xlu0 %v1702, 48
  %v2107 = vpop.permute.xlu0 %2106
  %2108 = vrot.lane.b32.xlu0 %v1705, 48
  %v2109 = vpop.permute.xlu0 %2108
  %2110 = vrot.lane.b32.xlu0 %v1707, 48
  %v2111 = vpop.permute.xlu0 %2110
  %2112 = vrot.lane.b32.xlu0 %v1710, 48
  %v2113 = vpop.permute.xlu0 %2112
  %2114 = vrot.lane.b32.xlu0 %v1712, 48
  %v2115 = vpop.permute.xlu0 %2114
  %2132 = vrot.lane.b32.xlu0 %v1913, 56
  %v2133 = vpop.permute.xlu0 %2132
  %2134 = vrot.lane.b32.xlu0 %v1915, 56
  %v2135 = vpop.permute.xlu0 %2134
  %2136 = vrot.lane.b32.xlu0 %v1918, 56
  %v2137 = vpop.permute.xlu0 %2136
  %2138 = vrot.lane.b32.xlu0 %v1920, 56
  %v2139 = vpop.permute.xlu0 %2138
  %2140 = vrot.lane.b32.xlu0 %v1923, 56
  %v2141 = vpop.permute.xlu0 %2140
  %2142 = vrot.lane.b32.xlu0 %v1925, 56
  %v2143 = vpop.permute.xlu0 %2142
  %2144 = vrot.lane.b32.xlu0 %v1928, 56
  %v2145 = vpop.permute.xlu0 %2144
  %2146 = vrot.lane.b32.xlu0 %v1930, 56
  %v2147 = vpop.permute.xlu0 %2146
  %vm2156 = vcmask 64512
  %v2157 = vsel %vm2156, %v387, %v1941
  %v2158 = vsel %vm2156, %v389, %v1943
  %v2159 = vsel %vm2156, %v392, %v1945
  %v2160 = vsel %vm2156, %v394, %v1947
  %v2161 = vsel %vm2156, %v397, %v1949
  %v2162 = vsel %vm2156, %v399, %v1951
  %v2163 = vsel %vm2156, %v402, %v1953
  %v2164 = vsel %vm2156, %v404, %v1955
  %v2165 = vsel %vm100, %v2157, %v1973
  %v2166 = vsel %vm100, %v2158, %v1975
  %v2167 = vsel %vm100, %v2159, %v1977
  %v2168 = vsel %vm100, %v2160, %v1979
  %v2169 = vsel %vm100, %v2161, %v1981
  %v2170 = vsel %vm100, %v2162, %v1983
  %v2171 = vsel %vm100, %v2163, %v1985
  %v2172 = vsel %vm100, %v2164, %v1987
  %vm2173 = vcmask 195584
  %v2174 = vsel %vm2173, %v2165, %v2005
  %v2175 = vsel %vm2173, %v2166, %v2007
  %v2176 = vsel %vm2173, %v2167, %v2009
  %v2177 = vsel %vm2173, %v2168, %v2011
  %v2178 = vsel %vm2173, %v2169, %v2013
  %v2179 = vsel %vm2173, %v2170, %v2015
  %v2180 = vsel %vm2173, %v2171, %v2017
  %v2181 = vsel %vm2173, %v2172, %v2019
  %vm2182 = vcmask 261120
  %v2183 = vsel %vm2182, %v2174, %v2037
  %v2184 = vsel %vm2182, %v2175, %v2039
  %v2185 = vsel %vm2182, %v2176, %v2041
  %v2186 = vsel %vm2182, %v2177, %v2043
  %v2187 = vsel %vm2182, %v2178, %v2045
  %v2188 = vsel %vm2182, %v2179, %v2047
  %v2189 = vsel %vm2182, %v2180, %v2049
  %v2190 = vsel %vm2182, %v2181, %v2051
  %vm2191 = vcmask 326656
  %v2192 = vsel %vm2191, %v2183, %v2069
  %v2193 = vsel %vm2191, %v2184, %v2071
  %v2194 = vsel %vm2191, %v2185, %v2073
  %v2195 = vsel %vm2191, %v2186, %v2075
  %v2196 = vsel %vm2191, %v2187, %v2077
  %v2197 = vsel %vm2191, %v2188, %v2079
  %v2198 = vsel %vm2191, %v2189, %v2081
  %v2199 = vsel %vm2191, %v2190, %v2083
  %vm2200 = vcmask 392192
  %v2201 = vsel %vm2200, %v2192, %v2101
  %v2202 = vsel %vm2200, %v2193, %v2103
  %v2203 = vsel %vm2200, %v2194, %v2105
  %v2204 = vsel %vm2200, %v2195, %v2107
  %v2205 = vsel %vm2200, %v2196, %v2109
  %v2206 = vsel %vm2200, %v2197, %v2111
  %v2207 = vsel %vm2200, %v2198, %v2113
  %v2208 = vsel %vm2200, %v2199, %v2115
  %vm2209 = vcmask 457728
  %v2210 = vsel %vm2209, %v2201, %v2133
  %v2211 = vsel %vm2209, %v2202, %v2135
  %v2212 = vsel %vm2209, %v2203, %v2137
  %v2213 = vsel %vm2209, %v2204, %v2139
  %v2214 = vsel %vm2209, %v2205, %v2141
  %v2215 = vsel %vm2209, %v2206, %v2143
  %v2216 = vsel %vm2209, %v2207, %v2145
  %v2217 = vsel %vm2209, %v2208, %v2147
  %v2218 = vld [vmem:[%s4] sm:$0x1]
  %v2220 = vperm.slane %v2218, 0
  %v2222 = vadd.f32 %v2210, %v2220
  %v2223 = vadd.f32 %v2211, %v2220
  %v2224 = vadd.f32 %v2212, %v2220
  %v2225 = vadd.f32 %v2213, %v2220
  %v2226 = vadd.f32 %v2214, %v2220
  %v2227 = vadd.f32 %v2215, %v2220
  %v2228 = vadd.f32 %v2216, %v2220
  %v2229 = vadd.f32 %v2217, %v2220
  %vm2230 = vcmp.gt.f32.partialorder %v2222, 0.0
  %vm2231 = vcmp.gt.f32.partialorder %v2223, 0.0
  %vm2232 = vcmp.gt.f32.partialorder %v2224, 0.0
  %vm2233 = vcmp.gt.f32.partialorder %v2225, 0.0
  %vm2234 = vcmp.gt.f32.partialorder %v2226, 0.0
  %vm2235 = vcmp.gt.f32.partialorder %v2227, 0.0
  %vm2236 = vcmp.gt.f32.partialorder %v2228, 0.0
  %vm2237 = vcmp.gt.f32.partialorder %v2229, 0.0
  %v2238 = vmin.f32 %v2222, 0.0
  %v2239 = vmin.f32 %v2223, 0.0
  %v2240 = vmin.f32 %v2224, 0.0
  %v2241 = vmin.f32 %v2225, 0.0
  %v2242 = vmin.f32 %v2226, 0.0
  %v2243 = vmin.f32 %v2227, 0.0
  %v2244 = vmin.f32 %v2228, 0.0
  %v2245 = vmin.f32 %v2229, 0.0
  %v2246 = vmul.f32 %v2238, 1.442695
  %v2247 = vpow.pop %v2246
  %v2248 = vmul.f32 %v2239, 1.442695
  %v2249 = vpow.pop %v2248
  %v2250 = vmul.f32 %v2240, 1.442695
  %v2251 = vpow.pop %v2250
  %v2252 = vmul.f32 %v2241, 1.442695
  %v2253 = vpow.pop %v2252
  %v2254 = vmul.f32 %v2242, 1.442695
  %v2255 = vpow.pop %v2254
  %v2256 = vmul.f32 %v2243, 1.442695
  %v2257 = vpow.pop %v2256
  %v2258 = vmul.f32 %v2244, 1.442695
  %v2259 = vpow.pop %v2258
  %v2260 = vmul.f32 %v2245, 1.442695
  %v2261 = vpow.pop %v2260
  %v2262 = vsub.f32 %v2247, 1.0
  %v2263 = vsub.f32 %v2249, 1.0
  %v2264 = vsub.f32 %v2251, 1.0
  %v2265 = vsub.f32 %v2253, 1.0
  %v2266 = vsub.f32 %v2255, 1.0
  %v2267 = vsub.f32 %v2257, 1.0
  %v2268 = vsub.f32 %v2259, 1.0
  %v2269 = vsub.f32 %v2261, 1.0
  %v2270 = vsel %vm2230, %v2222, %v2262
  %v2271 = vsel %vm2231, %v2223, %v2263
  %v2272 = vsel %vm2232, %v2224, %v2264
  %v2273 = vsel %vm2233, %v2225, %v2265
  %v2274 = vsel %vm2234, %v2226, %v2266
  %v2275 = vsel %vm2235, %v2227, %v2267
  %v2276 = vsel %vm2236, %v2228, %v2268
  %v2277 = vsel %vm2237, %v2229, %v2269
  %vm2278 = vcmp.gt.f32.partialorder %v2270, 0.0
  %vm2279 = vcmp.gt.f32.partialorder %v2271, 0.0
  %vm2280 = vcmp.gt.f32.partialorder %v2272, 0.0
  %vm2281 = vcmp.gt.f32.partialorder %v2273, 0.0
  %vm2282 = vcmp.gt.f32.partialorder %v2274, 0.0
  %vm2283 = vcmp.gt.f32.partialorder %v2275, 0.0
  %vm2284 = vcmp.gt.f32.partialorder %v2276, 0.0
  %vm2285 = vcmp.gt.f32.partialorder %v2277, 0.0
  %v2286 = vmin.f32 %v2270, 0.0
  %v2287 = vmin.f32 %v2271, 0.0
  %v2288 = vmin.f32 %v2272, 0.0
  %v2289 = vmin.f32 %v2273, 0.0
  %v2290 = vmin.f32 %v2274, 0.0
  %v2291 = vmin.f32 %v2275, 0.0
  %v2292 = vmin.f32 %v2276, 0.0
  %v2293 = vmin.f32 %v2277, 0.0
  %v2294 = vmul.f32 %v2286, 1.442695
  %v2295 = vpow.pop %v2294
  %v2296 = vmul.f32 %v2287, 1.442695
  %v2297 = vpow.pop %v2296
  %v2298 = vmul.f32 %v2288, 1.442695
  %v2299 = vpow.pop %v2298
  %v2300 = vmul.f32 %v2289, 1.442695
  %v2301 = vpow.pop %v2300
  %v2302 = vmul.f32 %v2290, 1.442695
  %v2303 = vpow.pop %v2302
  %v2304 = vmul.f32 %v2291, 1.442695
  %v2305 = vpow.pop %v2304
  %v2306 = vmul.f32 %v2292, 1.442695
  %v2307 = vpow.pop %v2306
  %v2308 = vmul.f32 %v2293, 1.442695
  %v2309 = vpow.pop %v2308
  %v2310 = vsub.f32 %v2295, 1.0
  %v2311 = vsub.f32 %v2297, 1.0
  %v2312 = vsub.f32 %v2299, 1.0
  %v2313 = vsub.f32 %v2301, 1.0
  %v2314 = vsub.f32 %v2303, 1.0
  %v2315 = vsub.f32 %v2305, 1.0
  %v2316 = vsub.f32 %v2307, 1.0
  %v2317 = vsub.f32 %v2309, 1.0
  %v2318 = vsel %vm2278, %v2270, %v2310
  %v2319 = vsel %vm2279, %v2271, %v2311
  %v2320 = vsel %vm2280, %v2272, %v2312
  %v2321 = vsel %vm2281, %v2273, %v2313
  %v2322 = vsel %vm2282, %v2274, %v2314
  %v2323 = vsel %vm2283, %v2275, %v2315
  %v2324 = vsel %vm2284, %v2276, %v2316
  %v2325 = vsel %vm2285, %v2277, %v2317
  %v2326 = vpack.c.bf16 %v2319, %v2318
  %v2327 = vpack.c.bf16 %v2321, %v2320
  %v2328 = vpack.c.bf16 %v2323, %v2322
  %v2329 = vpack.c.bf16 %v2325, %v2324
  %v2330 = vld [vmem:[%s5] sm:$0xf]
  %v2331 = vld [vmem:[%s5 + $0x4] sm:$0xf]
  %v2332 = vld [vmem:[%s5 + $0x8] sm:$0xf]
  %v2333 = vld [vmem:[%s5 + $0xc] sm:$0xf]
  %v2334 = vld [vmem:[%s5 + $0x10] sm:$0xf]
  %v2335 = vld [vmem:[%s5 + $0x14] sm:$0xf]
  %v2336 = vld [vmem:[%s5 + $0x18] sm:$0xf]
  %v2337 = vld [vmem:[%s5 + $0x1c] sm:$0xf]
  %v2346 = vunpack.c.l.b16 %v2330
  %v2347 = vunpack.c.l.b16 %v2331
  %v2348 = vunpack.c.l.b16 %v2332
  %v2349 = vunpack.c.l.b16 %v2333
  %v2350 = vunpack.c.l.b16 %v2334
  %v2351 = vunpack.c.l.b16 %v2335
  %v2352 = vunpack.c.l.b16 %v2336
  %v2353 = vunpack.c.l.b16 %v2337
  %v2354 = vpack.c.b16 %v2347, %v2346
  %v2355 = vpack.c.b16 %v2349, %v2348
  %v2356 = vpack.c.b16 %v2351, %v2350
  %v2357 = vpack.c.b16 %v2353, %v2352
  %v2363 = vsel %vm248, %v2326, 0
  %v2366 = vsel %vm248, %v2327, 0
  %v2369 = vsel %vm248, %v2328, 0
  %v2372 = vsel %vm248, %v2329, 0
  %2374 = vmatpush.bf16.msra.mxu0 0
  %2375 = vmatpush.bf16.msra.mxu0 0
  %2376 = vmatpush.bf16.msra.mxu0 0
  %2377 = vmatpush.bf16.msra.mxu0 0
  %2378 = vmatpush.bf16.msra.mxu0 %v2357
  %2379 = vmatpush.bf16.msra.mxu0 %v2356
  %2380 = vmatpush.bf16.msra.mxu0 %v2355
  %2381 = vmatpush.bf16.msra.mxu0 %v2354
  %2382 = vmatmul.bf16.gmra.mxu0 %v2363
  %v2383 = vpop.f32.mrf.mxu0
  %v2384 = vadd.f32 0.0, %v2383
  %v2385 = vpop.f32.mrf.mxu0
  %v2386 = vadd.f32 0.0, %v2385
  %2387 = vmatmul.bf16.gmra.mxu0 %v2366
  %v2388 = vpop.f32.mrf.mxu0
  %v2389 = vadd.f32 0.0, %v2388
  %v2390 = vpop.f32.mrf.mxu0
  %v2391 = vadd.f32 0.0, %v2390
  %2392 = vmatmul.bf16.gmra.mxu0 %v2369
  %v2393 = vpop.f32.mrf.mxu0
  %v2394 = vadd.f32 0.0, %v2393
  %v2395 = vpop.f32.mrf.mxu0
  %v2396 = vadd.f32 0.0, %v2395
  %2397 = vmatmul.bf16.gmra.mxu0 %v2372
  %v2398 = vpop.f32.mrf.mxu0
  %v2399 = vadd.f32 0.0, %v2398
  %v2400 = vpop.f32.mrf.mxu0
  %v2401 = vadd.f32 0.0, %v2400
  %2402 = vdwg.mxu0
  %v2403 = vld [vmem:[%s6] sm:$0x1]
  %v2405 = vsel %vm248, %v2403, 0
  %2407 = vmatpush.bf16.xpose.msra.mxu0 0
  %2408 = vmatpush.bf16.xpose.msra.mxu0 0
  %2409 = vmatpush.bf16.xpose.msra.mxu0 0
  %2410 = vmatpush.bf16.xpose.msra.mxu0 0
  %2411 = vmatpush.bf16.xpose.msra.mxu0 %v2372
  %2412 = vmatpush.bf16.xpose.msra.mxu0 %v2369
  %2413 = vmatpush.bf16.xpose.msra.mxu0 %v2366
  %2414 = vmatpush.bf16.xpose.msra.mxu0 %v2363
  %2415 = vmatmul.bf16.gmra.mxu0 %v2405
  %v2416 = vpop.f32.mrf.mxu0
  %v2417 = vadd.f32 0.0, %v2416
  %v2418 = vpop.f32.mrf.mxu0
  %2419 = vdwg.mxu0
  %2421 = vset.pattern.permute.xlu0 4
  %2422 = vperm.xlu0 %2421, %v2384
  %v2423 = vpop.permute.xlu0 %2422
  %2426 = vset.pattern.permute.xlu0 4
  %2427 = vperm.xlu0 %2426, %v2386
  %v2428 = vpop.permute.xlu0 %2427
  %2431 = vset.pattern.permute.xlu0 4
  %2432 = vperm.xlu0 %2431, %v2389
  %v2433 = vpop.permute.xlu0 %2432
  %2436 = vset.pattern.permute.xlu0 4
  %2437 = vperm.xlu0 %2436, %v2391
  %v2438 = vpop.permute.xlu0 %2437
  %2441 = vset.pattern.permute.xlu0 4
  %2442 = vperm.xlu0 %2441, %v2394
  %v2443 = vpop.permute.xlu0 %2442
  %2446 = vset.pattern.permute.xlu0 4
  %2447 = vperm.xlu0 %2446, %v2396
  %v2448 = vpop.permute.xlu0 %2447
  %2451 = vset.pattern.permute.xlu0 4
  %2452 = vperm.xlu0 %2451, %v2399
  %v2453 = vpop.permute.xlu0 %2452
  %2456 = vset.pattern.permute.xlu0 4
  %2457 = vperm.xlu0 %2456, %v2401
  %v2458 = vpop.permute.xlu0 %2457
  %v2460 = vperm.slane %v2417, 0
  %v2461 = vadd.f32 %v2423, %v2460
  %v2462 = vadd.f32 %v2428, %v2460
  %v2463 = vadd.f32 %v2433, %v2460
  %v2464 = vadd.f32 %v2438, %v2460
  %v2465 = vadd.f32 %v2443, %v2460
  %v2466 = vadd.f32 %v2448, %v2460
  %v2467 = vadd.f32 %v2453, %v2460
  %v2468 = vadd.f32 %v2458, %v2460
  %vm2469 = vcmp.gt.f32.partialorder %v2461, 0.0
  %vm2470 = vcmp.gt.f32.partialorder %v2462, 0.0
  %vm2471 = vcmp.gt.f32.partialorder %v2463, 0.0
  %vm2472 = vcmp.gt.f32.partialorder %v2464, 0.0
  %vm2473 = vcmp.gt.f32.partialorder %v2465, 0.0
  %vm2474 = vcmp.gt.f32.partialorder %v2466, 0.0
  %vm2475 = vcmp.gt.f32.partialorder %v2467, 0.0
  %vm2476 = vcmp.gt.f32.partialorder %v2468, 0.0
  %v2477 = vmul.f32 %v2461, 0.2
  %v2478 = vmul.f32 %v2462, 0.2
  %v2479 = vmul.f32 %v2463, 0.2
  %v2480 = vmul.f32 %v2464, 0.2
  %v2481 = vmul.f32 %v2465, 0.2
  %v2482 = vmul.f32 %v2466, 0.2
  %v2483 = vmul.f32 %v2467, 0.2
  %v2484 = vmul.f32 %v2468, 0.2
  %v2485 = vsel %vm2469, %v2461, %v2477
  %v2486 = vsel %vm2470, %v2462, %v2478
  %v2487 = vsel %vm2471, %v2463, %v2479
  %v2488 = vsel %vm2472, %v2464, %v2480
  %v2489 = vsel %vm2473, %v2465, %v2481
  %v2490 = vsel %vm2474, %v2466, %v2482
  %v2491 = vsel %vm2475, %v2467, %v2483
  %v2492 = vsel %vm2476, %v2468, %v2484
  %v2493 = vadd.f32 %v2485, %v56
  %v2494 = vadd.f32 %v2486, %v57
  %v2495 = vadd.f32 %v2487, %v58
  %v2496 = vadd.f32 %v2488, %v59
  %v2497 = vadd.f32 %v2489, %v60
  %v2498 = vadd.f32 %v2490, %v61
  %v2499 = vadd.f32 %v2491, %v62
  %v2500 = vadd.f32 %v2492, %v63
  %v2501 = vsel %vm248, %v2493, -inf
  %2502 = vmax.xlane.f32.xlu0 %v2501
  %v2503 = vpop.xlane.xlu0 %2502
  %v2504 = vsel %vm248, %v2494, -inf
  %2505 = vmax.xlane.f32.xlu0 %v2504
  %v2506 = vpop.xlane.xlu0 %2505
  %v2507 = vsel %vm248, %v2495, -inf
  %2508 = vmax.xlane.f32.xlu0 %v2507
  %v2509 = vpop.xlane.xlu0 %2508
  %v2510 = vsel %vm248, %v2496, -inf
  %2511 = vmax.xlane.f32.xlu0 %v2510
  %v2512 = vpop.xlane.xlu0 %2511
  %v2513 = vsel %vm248, %v2497, -inf
  %2514 = vmax.xlane.f32.xlu0 %v2513
  %v2515 = vpop.xlane.xlu0 %2514
  %v2516 = vsel %vm248, %v2498, -inf
  %2517 = vmax.xlane.f32.xlu0 %v2516
  %v2518 = vpop.xlane.xlu0 %2517
  %v2519 = vsel %vm248, %v2499, -inf
  %2520 = vmax.xlane.f32.xlu0 %v2519
  %v2521 = vpop.xlane.xlu0 %2520
  %v2522 = vsel %vm248, %v2500, -inf
  %2523 = vmax.xlane.f32.xlu0 %v2522
  %v2524 = vpop.xlane.xlu0 %2523
  %v2525 = vsub.f32 %v2493, %v2503
  %v2526 = vsub.f32 %v2494, %v2506
  %v2527 = vsub.f32 %v2495, %v2509
  %v2528 = vsub.f32 %v2496, %v2512
  %v2529 = vsub.f32 %v2497, %v2515
  %v2530 = vsub.f32 %v2498, %v2518
  %v2531 = vsub.f32 %v2499, %v2521
  %v2532 = vsub.f32 %v2500, %v2524
  %v2533 = vmul.f32 %v2525, 1.442695
  %v2534 = vpow.pop %v2533
  %v2535 = vmul.f32 %v2526, 1.442695
  %v2536 = vpow.pop %v2535
  %v2537 = vmul.f32 %v2527, 1.442695
  %v2538 = vpow.pop %v2537
  %v2539 = vmul.f32 %v2528, 1.442695
  %v2540 = vpow.pop %v2539
  %v2541 = vmul.f32 %v2529, 1.442695
  %v2542 = vpow.pop %v2541
  %v2543 = vmul.f32 %v2530, 1.442695
  %v2544 = vpow.pop %v2543
  %v2545 = vmul.f32 %v2531, 1.442695
  %v2546 = vpow.pop %v2545
  %v2547 = vmul.f32 %v2532, 1.442695
  %v2548 = vpow.pop %v2547
  %v2549 = vsel %vm248, %v2534, 0.0
  %2550 = vadd.xlane.f32.xlu0 %v2549
  %v2551 = vpop.xlane.xlu0 %2550
  %v2552 = vsel %vm248, %v2536, 0.0
  %2553 = vadd.xlane.f32.xlu0 %v2552
  %v2554 = vpop.xlane.xlu0 %2553
  %v2555 = vsel %vm248, %v2538, 0.0
  %2556 = vadd.xlane.f32.xlu0 %v2555
  %v2557 = vpop.xlane.xlu0 %2556
  %v2558 = vsel %vm248, %v2540, 0.0
  %2559 = vadd.xlane.f32.xlu0 %v2558
  %v2560 = vpop.xlane.xlu0 %2559
  %v2561 = vsel %vm248, %v2542, 0.0
  %2562 = vadd.xlane.f32.xlu0 %v2561
  %v2563 = vpop.xlane.xlu0 %2562
  %v2564 = vsel %vm248, %v2544, 0.0
  %2565 = vadd.xlane.f32.xlu0 %v2564
  %v2566 = vpop.xlane.xlu0 %2565
  %v2567 = vsel %vm248, %v2546, 0.0
  %2568 = vadd.xlane.f32.xlu0 %v2567
  %v2569 = vpop.xlane.xlu0 %2568
  %v2570 = vsel %vm248, %v2548, 0.0
  %2571 = vadd.xlane.f32.xlu0 %v2570
  %v2572 = vpop.xlane.xlu0 %2571
  %v2573 = vrcp.pop %v2551
  %v2574 = vrcp.pop %v2554
  %v2575 = vrcp.pop %v2557
  %v2576 = vrcp.pop %v2560
  %v2577 = vrcp.pop %v2563
  %v2578 = vrcp.pop %v2566
  %v2579 = vrcp.pop %v2569
  %v2580 = vrcp.pop %v2572
  %v2581 = vmul.f32 %v2534, %v2573
  %v2582 = vmul.f32 %v2536, %v2574
  %v2583 = vmul.f32 %v2538, %v2575
  %v2584 = vmul.f32 %v2540, %v2576
  %v2585 = vmul.f32 %v2542, %v2577
  %v2586 = vmul.f32 %v2544, %v2578
  %v2587 = vmul.f32 %v2546, %v2579
  %v2588 = vmul.f32 %v2548, %v2580
  %v2589 = vpack.c.bf16 %v2582, %v2581
  %v2590 = vpack.c.bf16 %v2584, %v2583
  %v2591 = vpack.c.bf16 %v2586, %v2585
  %v2592 = vpack.c.bf16 %v2588, %v2587
  %v2593 = vpack.c.bf16 %v2386, %v2384
  %v2594 = vpack.c.bf16 %v2391, %v2389
  %v2595 = vpack.c.bf16 %v2396, %v2394
  %v2596 = vpack.c.bf16 %v2401, %v2399
  %v2597 = vld [vmem:[%s7] sm:$0x1]
  %v2599 = vperm.slane %v2597, 0
  %v2602 = vsel %vm248, %v2589, 0
  %v2605 = vsel %vm248, %v2590, 0
  %v2608 = vsel %vm248, %v2591, 0
  %v2611 = vsel %vm248, %v2592, 0
  %2613 = vmatpush.bf16.msra.mxu0 0
  %2614 = vmatpush.bf16.msra.mxu0 0
  %2615 = vmatpush.bf16.msra.mxu0 0
  %2616 = vmatpush.bf16.msra.mxu0 0
  %2617 = vmatpush.bf16.msra.mxu0 %v2596
  %2618 = vmatpush.bf16.msra.mxu0 %v2595
  %2619 = vmatpush.bf16.msra.mxu0 %v2594
  %2620 = vmatpush.bf16.msra.mxu0 %v2593
  %2621 = vmatmul.bf16.gmra.mxu0 %v2602
  %v2622 = vpop.f32.mrf.mxu0
  %v2623 = vadd.f32 %v2599, %v2622
  %v2624 = vpop.f32.mrf.mxu0
  %v2625 = vadd.f32 %v2599, %v2624
  %2626 = vmatmul.bf16.gmra.mxu0 %v2605
  %v2627 = vpop.f32.mrf.mxu0
  %v2628 = vadd.f32 %v2599, %v2627
  %v2629 = vpop.f32.mrf.mxu0
  %v2630 = vadd.f32 %v2599, %v2629
  %2631 = vmatmul.bf16.gmra.mxu0 %v2608
  %v2632 = vpop.f32.mrf.mxu0
  %v2633 = vadd.f32 %v2599, %v2632
  %v2634 = vpop.f32.mrf.mxu0
  %v2635 = vadd.f32 %v2599, %v2634
  %2636 = vmatmul.bf16.gmra.mxu0 %v2611
  %v2637 = vpop.f32.mrf.mxu0
  %v2638 = vadd.f32 %v2599, %v2637
  %v2639 = vpop.f32.mrf.mxu0
  %v2640 = vadd.f32 %v2599, %v2639
  %2641 = vdwg.mxu0
  %vm2642 = vcmask 31744
  %2643 = vst.msk [vmem:[%s8] sm:$0xff] %vm2642, %v2623
  %2644 = vst.msk [vmem:[%s8 + $0x8] sm:$0xff] %vm2642, %v2625
  %2645 = vst.msk [vmem:[%s8 + $0x10] sm:$0xff] %vm2642, %v2628
  %2646 = vst.msk [vmem:[%s8 + $0x18] sm:$0xff] %vm2642, %v2630
  %2647 = vst.msk [vmem:[%s8 + $0x20] sm:$0xff] %vm2642, %v2633
  %2648 = vst.msk [vmem:[%s8 + $0x28] sm:$0xff] %vm2642, %v2635
  %2649 = vst.msk [vmem:[%s8 + $0x30] sm:$0xff] %vm2642, %v2638
  %2650 = vst.msk [vmem:[%s8 + $0x38] sm:$0xff] %vm2642, %v2640
  // Predicated region
  $region34: #{gat_full_dgl_forward.1} parent=0 // pred_check
    _
  $region35: #{gat_full_dgl_forward.1} parent=0 // pred_check_branch
    %2652 = sbr.rel (0) target = $region37
  $region36: #{gat_full_dgl_forward.1} parent=0 // pred_region
    _
  $region37: #{gat_full_dgl_forward.1} parent=0 // pred_fallthru
    _
  // Predicated region
  $region38: #{gat_full_dgl_forward.1} parent=0 // pred_check
    _
  $region39: #{gat_full_dgl_forward.1} parent=0 // pred_check_branch
    %2654 = sbr.rel (0) target = $region41
  $region40: #{gat_full_dgl_forward.1} parent=0 // pred_region
    _
  $region41: #{gat_full_dgl_forward.1} parent=0 // pred_fallthru
    _

</llo_original>
